<compile_context>
chip_gen: v7x
topology: tpu7x:2x2x1
jax: 0.10.0
libtpu: 0.0.40
codegen_flags: <defaults>
</compile_context>

<pallas_src>
import numpy as np
import jax
import jax.numpy as jnp
from jax.experimental import pallas as pl
from jax.experimental.pallas import tpu as pltpu


# ----------------------- parameter init (PyTorch layout) ----------------------

def init_generator_params(key, random_dim=32, side=16, num_channels=4):
    """Deterministic parameter init mirroring `determine_layers_gen`."""
    layer_dims = [(1, side), (num_channels, side // 2)]
    while layer_dims[-1][1] > 3 and len(layer_dims) < 4:
        layer_dims.append((layer_dims[-1][0] * 2, layer_dims[-1][1] // 2))

    keys = jax.random.split(key, 16)
    ki = 0
    params = []

    # First ConvTranspose2d: random_dim -> C0, kernel K0, stride 1, pad 0, no bias.
    c0, k0 = layer_dims[-1]
    params.append(dict(
        kind="convT", stride=1, padding=0,
        w=0.02 * jax.random.normal(keys[ki], (random_dim, c0, k0, k0), jnp.float32),
        b=None))
    ki += 1

    # Blocks: BatchNorm2d + ReLU + ConvTranspose2d(k=4, s=2, p=1, bias=True)
    for prev, curr in zip(reversed(layer_dims), reversed(layer_dims[:-1])):
        c_in, c_out = prev[0], curr[0]
        params.append(dict(
            kind="bn_relu",
            gamma=1.0 + 0.1 * jax.random.normal(keys[ki], (c_in,), jnp.float32),
            beta=0.1 * jax.random.normal(keys[ki + 1], (c_in,), jnp.float32)))
        ki += 2
        params.append(dict(
            kind="convT", stride=2, padding=1,
            w=0.02 * jax.random.normal(keys[ki], (c_in, c_out, 4, 4), jnp.float32),
            b=0.01 * jax.random.normal(keys[ki + 1], (c_out,), jnp.float32)))
        ki += 2
    return params


# ------------------ offline lowering of layers (runs once) --------------------

def _lower_conv_transpose(weight, bias, stride, padding, h_in, w_in):
    """Lower ConvTranspose2d to a dense matrix on channel-major feature vectors.

    Feature layout: index = c * (H*W) + h*W + w.
    M[ci*Sin + h*Win + w, co*Sout + oh*Wout + ow] = W[ci, co, kh, kw]
      where oh = stride*h - padding + kh, ow = stride*w - padding + kw.
    """
    w_np = np.asarray(weight, np.float32)
    cin, cout, k, _ = w_np.shape
    oh_sz = (h_in - 1) * stride - 2 * padding + k
    ow_sz = (w_in - 1) * stride - 2 * padding + k
    s_in, s_out = h_in * w_in, oh_sz * ow_sz

    m = np.zeros((cin * s_in, cout * s_out), np.float32)
    for ci in range(cin):
        for hi in range(h_in):
            for wi in range(w_in):
                row = ci * s_in + hi * w_in + wi
                for kh in range(k):
                    oh = stride * hi - padding + kh
                    if oh < 0 or oh >= oh_sz:
                        continue
                    for kw in range(k):
                        ow = stride * wi - padding + kw
                        if ow < 0 or ow >= ow_sz:
                            continue
                        cols = np.arange(cout) * s_out + oh * ow_sz + ow
                        m[row, cols] += w_np[ci, :, kh, kw]

    if bias is None:
        b_full = np.zeros((1, cout * s_out), np.float32)
    else:
        b_full = np.repeat(np.asarray(bias, np.float32), s_out)[None, :]
    return m, b_full, cout, oh_sz, ow_sz


def _round_up_128(n):
    return ((n + 127) // 128) * 128


def _pad2d(a, shape):
    out = np.zeros(shape, np.float32)
    out[:a.shape[0], :a.shape[1]] = a
    return out


def prepare_generator(params):
    """Precompute all kernel-ready matrices (layout work hoisted out of the
    forward pass).  Conv matrices are bf16; thin BN pool/broadcast matrices,
    gamma/beta and the final bias stay f32."""
    assert params and params[0]["kind"] == "convT"
    p0 = params[0]
    m0, _b0, c, h, w = _lower_conv_transpose(
        p0["w"], None, p0["stride"], p0["padding"], 1, 1)
    f = c * h * w
    fp = _round_up_128(f)                       # lane-dense intermediate width
    arrays = [jnp.asarray(_pad2d(m0, (m0.shape[0], fp)), jnp.bfloat16)]

    num_blocks = 0
    last_bias = None
    i = 1
    while i < len(params):
        bn, conv = params[i], params[i + 1]
        assert bn["kind"] == "bn_relu" and conv["kind"] == "convT"
        s = h * w
        # Thin pool-down (fp, c): per-channel mean over spatial; padded rows 0.
        pool = np.zeros((fp, c), np.float32)
        # Thin broadcast-up (c, fp): per-channel value -> feature layout.
        bcast = np.zeros((c, fp), np.float32)
        for ci in range(c):
            pool[ci * s:(ci + 1) * s, ci] = 1.0 / s
            bcast[ci, ci * s:(ci + 1) * s] = 1.0
        gb = np.stack([np.asarray(bn["gamma"], np.float32),
                       np.asarray(bn["beta"], np.float32)], axis=0)  # (2, c)
        arrays += [jnp.asarray(pool), jnp.asarray(bcast), jnp.asarray(gb)]

        is_last = (i + 2 >= len(params))
        # Biases of convs that feed a training-mode BatchNorm are exactly
        # cancelled by the mean subtraction -> only emit the final conv's bias.
        m, b_full, c, h, w = _lower_conv_transpose(
            conv["w"], conv["b"] if is_last else None,
            conv["stride"], conv["padding"], h, w)
        f_new = c * h * w
        fp_new = _round_up_128(f_new)
        arrays.append(jnp.asarray(_pad2d(m, (fp, fp_new)), jnp.bfloat16))
        if is_last:
            last_bias = jnp.asarray(_pad2d(b_full, (1, fp_new)), jnp.float32)
        f, fp = f_new, fp_new
        num_blocks += 1
        i += 2

    if last_bias is None:
        last_bias = jnp.zeros((1, fp), jnp.float32)
    arrays.append(last_bias)
    return dict(arrays=tuple(arrays), num_blocks=num_blocks,
                out_cwh=(c, h, w), f_last=fp)


# ------------------------------- fused kernel ---------------------------------

def _bn_relu(a, pool, bcast, gamma_beta):
    """Training-mode BatchNorm2d (biased variance, eps=1e-5) + ReLU on a
    channel-major (B, F) f32 activation.

    Per-channel mean and E[x^2] come from ONE stacked thin matmul (2,F)@(F,C);
    the folded per-channel scale/shift are expanded back with one (2,C)@(C,F)
    matmul.  All statistics arithmetic stays in f32."""
    inv_n = 1.0 / a.shape[0]
    s1 = jnp.sum(a, axis=0, keepdims=True)              # (1, F)
    s2 = jnp.sum(a * a, axis=0, keepdims=True)          # (1, F)
    stats = jnp.concatenate([s1, s2], axis=0)            # (2, F)
    per_ch = jnp.dot(stats, pool,
                     preferred_element_type=jnp.float32) * inv_n   # (2, C)
    mean_c = per_ch[0:1]
    var_c = per_ch[1:2] - mean_c * mean_c
    inv_c = jax.lax.rsqrt(var_c + 1e-5)
    scale_c = gamma_beta[0:1] * inv_c                     # gamma / std
    shift_c = gamma_beta[1:2] - mean_c * scale_c          # beta - mean*scale
    sc_sh = jnp.concatenate([scale_c, shift_c], axis=0)   # (2, C)
    full = jnp.dot(sc_sh, bcast,
                   preferred_element_type=jnp.float32)    # (2, F)
    return jnp.maximum(a * full[0:1] + full[1:2], 0.0)


def _make_generator_kernel(num_blocks):
    # refs layout: z, M0, then per block (pool, bcast, gamma_beta, M),
    # then the final-conv bias row, then the output ref.
    def kernel(*refs):
        z_ref = refs[0]
        o_ref = refs[-1]
        a = jnp.dot(z_ref[...].astype(jnp.bfloat16), refs[1][...],
                    preferred_element_type=jnp.float32)
        idx = 2
        for _ in range(num_blocks):
            pool_ref, bcast_ref, gb_ref, m_ref = refs[idx:idx + 4]
            idx += 4
            a = _bn_relu(a, pool_ref[...], bcast_ref[...], gb_ref[...])
            a = jnp.dot(a.astype(jnp.bfloat16), m_ref[...],
                        preferred_element_type=jnp.float32)
        o_ref[...] = a + refs[idx][...]
    return kernel


def make_generator_forward(packed):
    num_blocks = packed["num_blocks"]
    c_out, h_out, w_out = packed["out_cwh"]
    out_feat = c_out * h_out * w_out
    f_last = packed["f_last"]
    kernel = _make_generator_kernel(num_blocks)
    arrays = packed["arrays"]

    @jax.jit
    def forward(arrs, z):
        b = z.shape[0]
        z2d = z.reshape(b, -1).astype(jnp.float32)        # (B, random_dim)
        inputs = (z2d,) + tuple(arrs)
        # No grid: the whole (tiny) network + batch fits in VMEM in one shot.
        flat = pl.pallas_call(
            kernel,
            out_shape=jax.ShapeDtypeStruct((b, f_last), jnp.float32),
            in_specs=[pl.BlockSpec(memory_space=pltpu.MemorySpace.VMEM)
                      for _ in inputs],
            out_specs=pl.BlockSpec(memory_space=pltpu.MemorySpace.VMEM),
        )(*inputs)
        if f_last != out_feat:
            flat = flat[:, :out_feat]
        # channel-major flat layout == NCHW after reshape.
        return flat.reshape(b, c_out, h_out, w_out)

    return lambda z: forward(arrays, z)


# ---------------------- plain-JAX reference (self-check) ----------------------

def _ref_conv_transpose(x, weight, bias, stride, padding):
    B, Cin, H, W = x.shape
    _, Cout, K, _ = weight.shape
    OH = (H - 1) * stride - 2 * padding + K
    OW = (W - 1) * stride - 2 * padding + K
    if stride > 1:
        xd = jnp.zeros((B, Cin, (H - 1) * stride + 1, (W - 1) * stride + 1),
                       x.dtype)
        xd = xd.at[:, :, ::stride, ::stride].set(x)
    else:
        xd = x
    p = K - 1 - padding
    xp = jnp.pad(xd, ((0, 0), (0, 0), (p, p), (p, p)))
    cols = []
    for kh in range(K):
        for kw in range(K):
            cols.append(xp[:, :, kh:kh + OH, kw:kw + OW])
    pat = jnp.stack(cols, axis=0).reshape(K, K, B, Cin, OH, OW)
    pat = pat.transpose(2, 4, 5, 0, 1, 3).reshape(B * OH * OW, K * K * Cin)
    wmat = jnp.flip(weight, axis=(2, 3)).transpose(2, 3, 0, 1)
    wmat = wmat.reshape(K * K * Cin, Cout)
    y = jnp.dot(pat, wmat, precision=jax.lax.Precision.HIGHEST)
    if bias is not None:
        y = y + bias[None, :]
    return y.reshape(B, OH, OW, Cout).transpose(0, 3, 1, 2)


def _ref_bn_relu(x, gamma, beta):
    mean = x.mean(axis=(0, 2, 3), keepdims=True)
    var = ((x - mean) ** 2).mean(axis=(0, 2, 3), keepdims=True)
    y = (x - mean) * jax.lax.rsqrt(var + 1e-5)
    y = y * gamma[None, :, None, None] + beta[None, :, None, None]
    return jnp.maximum(y, 0.0)


def generator_forward_reference(params, z):
    x = z
    for p in params:
        if p["kind"] == "convT":
            x = _ref_conv_transpose(x, p["w"], p["b"], p["stride"], p["padding"])
        else:
            x = _ref_bn_relu(x, p["gamma"], p["beta"])
    return x


# ----------------------------------- main ------------------------------------

if __name__ == "__main__":
    key = jax.random.PRNGKey(0)
    k_params, k_noise = jax.random.split(key)

    params = init_generator_params(k_params, random_dim=32, side=16,
                                   num_channels=4)
    packed = prepare_generator(params)
    generator = make_generator_forward(packed)

    # Noise input, NCHW: (batch=2, random_dim=32, 1, 1)
    z = jax.random.normal(k_noise, (2, 32, 1, 1), jnp.float32)

    out = jax.block_until_ready(generator(z))
    assert out.shape == (2, 1, 16, 16), out.shape
    assert bool(jnp.all(jnp.isfinite(out)))

    # Cross-check the fused Pallas kernel against a plain-JAX reference.
    ref = jax.block_until_ready(generator_forward_reference(params, z))
    np.testing.assert_allclose(np.asarray(out), np.asarray(ref),
                               atol=5e-2, rtol=5e-2)

    print("KERNEL_OK")
</pallas_src>

<mosaic_0001>
module attributes {stable_mosaic.version = 11 : i64} {
  func.func @kernel(%arg0: memref<2x32xf32, #tpu.memory_space<vmem>>, %arg1: memref<32x128xbf16, #tpu.memory_space<vmem>>, %arg2: memref<128x16xf32, #tpu.memory_space<vmem>>, %arg3: memref<16x128xf32, #tpu.memory_space<vmem>>, %arg4: memref<2x16xf32, #tpu.memory_space<vmem>>, %arg5: memref<128x128xbf16, #tpu.memory_space<vmem>>, %arg6: memref<128x8xf32, #tpu.memory_space<vmem>>, %arg7: memref<8x128xf32, #tpu.memory_space<vmem>>, %arg8: memref<2x8xf32, #tpu.memory_space<vmem>>, %arg9: memref<128x256xbf16, #tpu.memory_space<vmem>>, %arg10: memref<256x4xf32, #tpu.memory_space<vmem>>, %arg11: memref<4x256xf32, #tpu.memory_space<vmem>>, %arg12: memref<2x4xf32, #tpu.memory_space<vmem>>, %arg13: memref<256x256xbf16, #tpu.memory_space<vmem>>, %arg14: memref<1x256xf32, #tpu.memory_space<vmem>>, %arg15: memref<2x256xf32, #tpu.memory_space<vmem>>) attributes {dimension_semantics = [], scalar_prefetch = 0 : i64, scratch_operands = 0 : i64, tpu.core_type = #tpu.core_type<tc>} {
    %c0 = arith.constant 0 : index
    %c0_0 = arith.constant 0 : index
    %0 = vector.load %arg0[%c0, %c0_0] : memref<2x32xf32, #tpu.memory_space<vmem>>, vector<2x32xf32>
    %1 = arith.truncf %0 : vector<2x32xf32> to vector<2x32xbf16>
    %c0_1 = arith.constant 0 : index
    %c0_2 = arith.constant 0 : index
    %2 = vector.load %arg1[%c0_1, %c0_2] : memref<32x128xbf16, #tpu.memory_space<vmem>>, vector<32x128xbf16>
    %cst = arith.constant dense<0.000000e+00> : vector<2x128xf32>
    %3 = tpu.matmul %1, %2, %cst {dimension_numbers = #tpu.dot_dimension_numbers<[1], [0], [0], [1], [0, 0, 1, 1], [], []>} : vector<2x32xbf16>, vector<32x128xbf16>, vector<2x128xf32> -> vector<2x128xf32>
    %c0_3 = arith.constant 0 : index
    %c0_4 = arith.constant 0 : index
    %4 = vector.load %arg2[%c0_3, %c0_4] : memref<128x16xf32, #tpu.memory_space<vmem>>, vector<128x16xf32>
    %c0_5 = arith.constant 0 : index
    %c0_6 = arith.constant 0 : index
    %5 = vector.load %arg3[%c0_5, %c0_6] : memref<16x128xf32, #tpu.memory_space<vmem>>, vector<16x128xf32>
    %c0_7 = arith.constant 0 : index
    %c0_8 = arith.constant 0 : index
    %6 = vector.load %arg4[%c0_7, %c0_8] : memref<2x16xf32, #tpu.memory_space<vmem>>, vector<2x16xf32>
    %cst_9 = arith.constant dense<0.000000e+00> : vector<128xf32>
    %7 = vector.multi_reduction <add>, %3, %cst_9 [0] : vector<2x128xf32> to vector<128xf32>
    %8 = vector.shape_cast %7 : vector<128xf32> to vector<1x128xf32>
    %9 = arith.mulf %3, %3 : vector<2x128xf32>
    %cst_10 = arith.constant dense<0.000000e+00> : vector<128xf32>
    %10 = vector.multi_reduction <add>, %9, %cst_10 [0] : vector<2x128xf32> to vector<128xf32>
    %11 = vector.shape_cast %10 : vector<128xf32> to vector<1x128xf32>
    %12 = tpu.concatenate %8, %11 in 0 : vector<1x128xf32>, vector<1x128xf32> -> vector<2x128xf32>
    %cst_11 = arith.constant dense<0.000000e+00> : vector<2x16xf32>
    %13 = tpu.matmul %12, %4, %cst_11 {dimension_numbers = #tpu.dot_dimension_numbers<[1], [0], [0], [1], [0, 0, 1, 1], [], []>} : vector<2x128xf32>, vector<128x16xf32>, vector<2x16xf32> -> vector<2x16xf32>
    %cst_12 = arith.constant 5.000000e-01 : f32
    %14 = vector.broadcast %cst_12 : f32 to vector<2x16xf32>
    %15 = arith.mulf %13, %14 : vector<2x16xf32>
    %16 = vector.extract_strided_slice %15 {offsets = [0, 0], sizes = [1, 16], strides = [1, 1]} : vector<2x16xf32> to vector<1x16xf32>
    %17 = vector.extract_strided_slice %15 {offsets = [1, 0], sizes = [1, 16], strides = [1, 1]} : vector<2x16xf32> to vector<1x16xf32>
    %18 = arith.mulf %16, %16 : vector<1x16xf32>
    %19 = arith.subf %17, %18 : vector<1x16xf32>
    %cst_13 = arith.constant 9.99999974E-6 : f32
    %20 = vector.broadcast %cst_13 : f32 to vector<1x16xf32>
    %21 = arith.addf %19, %20 : vector<1x16xf32>
    %22 = math.rsqrt %21 : vector<1x16xf32>
    %23 = vector.extract_strided_slice %6 {offsets = [0, 0], sizes = [1, 16], strides = [1, 1]} : vector<2x16xf32> to vector<1x16xf32>
    %24 = arith.mulf %23, %22 : vector<1x16xf32>
    %25 = vector.extract_strided_slice %6 {offsets = [1, 0], sizes = [1, 16], strides = [1, 1]} : vector<2x16xf32> to vector<1x16xf32>
    %26 = arith.mulf %16, %24 : vector<1x16xf32>
    %27 = arith.subf %25, %26 : vector<1x16xf32>
    %28 = tpu.concatenate %24, %27 in 0 : vector<1x16xf32>, vector<1x16xf32> -> vector<2x16xf32>
    %cst_14 = arith.constant dense<0.000000e+00> : vector<2x128xf32>
    %29 = tpu.matmul %28, %5, %cst_14 {dimension_numbers = #tpu.dot_dimension_numbers<[1], [0], [0], [1], [0, 0, 1, 1], [], []>} : vector<2x16xf32>, vector<16x128xf32>, vector<2x128xf32> -> vector<2x128xf32>
    %30 = vector.extract_strided_slice %29 {offsets = [0, 0], sizes = [1, 128], strides = [1, 1]} : vector<2x128xf32> to vector<1x128xf32>
    %31 = vector.broadcast %30 : vector<1x128xf32> to vector<2x128xf32>
    %32 = arith.mulf %3, %31 : vector<2x128xf32>
    %33 = vector.extract_strided_slice %29 {offsets = [1, 0], sizes = [1, 128], strides = [1, 1]} : vector<2x128xf32> to vector<1x128xf32>
    %34 = vector.broadcast %33 : vector<1x128xf32> to vector<2x128xf32>
    %35 = arith.addf %32, %34 : vector<2x128xf32>
    %cst_15 = arith.constant 0.000000e+00 : f32
    %36 = vector.broadcast %cst_15 : f32 to vector<2x128xf32>
    %37 = arith.maximumf %35, %36 : vector<2x128xf32>
    %38 = arith.truncf %37 : vector<2x128xf32> to vector<2x128xbf16>
    %c0_16 = arith.constant 0 : index
    %c0_17 = arith.constant 0 : index
    %39 = vector.load %arg5[%c0_16, %c0_17] : memref<128x128xbf16, #tpu.memory_space<vmem>>, vector<128x128xbf16>
    %cst_18 = arith.constant dense<0.000000e+00> : vector<2x128xf32>
    %40 = tpu.matmul %38, %39, %cst_18 {dimension_numbers = #tpu.dot_dimension_numbers<[1], [0], [0], [1], [0, 0, 1, 1], [], []>} : vector<2x128xbf16>, vector<128x128xbf16>, vector<2x128xf32> -> vector<2x128xf32>
    %c0_19 = arith.constant 0 : index
    %c0_20 = arith.constant 0 : index
    %41 = vector.load %arg6[%c0_19, %c0_20] : memref<128x8xf32, #tpu.memory_space<vmem>>, vector<128x8xf32>
    %c0_21 = arith.constant 0 : index
    %c0_22 = arith.constant 0 : index
    %42 = vector.load %arg7[%c0_21, %c0_22] : memref<8x128xf32, #tpu.memory_space<vmem>>, vector<8x128xf32>
    %c0_23 = arith.constant 0 : index
    %c0_24 = arith.constant 0 : index
    %43 = vector.load %arg8[%c0_23, %c0_24] : memref<2x8xf32, #tpu.memory_space<vmem>>, vector<2x8xf32>
    %cst_25 = arith.constant dense<0.000000e+00> : vector<128xf32>
    %44 = vector.multi_reduction <add>, %40, %cst_25 [0] : vector<2x128xf32> to vector<128xf32>
    %45 = vector.shape_cast %44 : vector<128xf32> to vector<1x128xf32>
    %46 = arith.mulf %40, %40 : vector<2x128xf32>
    %cst_26 = arith.constant dense<0.000000e+00> : vector<128xf32>
    %47 = vector.multi_reduction <add>, %46, %cst_26 [0] : vector<2x128xf32> to vector<128xf32>
    %48 = vector.shape_cast %47 : vector<128xf32> to vector<1x128xf32>
    %49 = tpu.concatenate %45, %48 in 0 : vector<1x128xf32>, vector<1x128xf32> -> vector<2x128xf32>
    %cst_27 = arith.constant dense<0.000000e+00> : vector<2x8xf32>
    %50 = tpu.matmul %49, %41, %cst_27 {dimension_numbers = #tpu.dot_dimension_numbers<[1], [0], [0], [1], [0, 0, 1, 1], [], []>} : vector<2x128xf32>, vector<128x8xf32>, vector<2x8xf32> -> vector<2x8xf32>
    %cst_28 = arith.constant 5.000000e-01 : f32
    %51 = vector.broadcast %cst_28 : f32 to vector<2x8xf32>
    %52 = arith.mulf %50, %51 : vector<2x8xf32>
    %53 = vector.extract_strided_slice %52 {offsets = [0, 0], sizes = [1, 8], strides = [1, 1]} : vector<2x8xf32> to vector<1x8xf32>
    %54 = vector.extract_strided_slice %52 {offsets = [1, 0], sizes = [1, 8], strides = [1, 1]} : vector<2x8xf32> to vector<1x8xf32>
    %55 = arith.mulf %53, %53 : vector<1x8xf32>
    %56 = arith.subf %54, %55 : vector<1x8xf32>
    %cst_29 = arith.constant 9.99999974E-6 : f32
    %57 = vector.broadcast %cst_29 : f32 to vector<1x8xf32>
    %58 = arith.addf %56, %57 : vector<1x8xf32>
    %59 = math.rsqrt %58 : vector<1x8xf32>
    %60 = vector.extract_strided_slice %43 {offsets = [0, 0], sizes = [1, 8], strides = [1, 1]} : vector<2x8xf32> to vector<1x8xf32>
    %61 = arith.mulf %60, %59 : vector<1x8xf32>
    %62 = vector.extract_strided_slice %43 {offsets = [1, 0], sizes = [1, 8], strides = [1, 1]} : vector<2x8xf32> to vector<1x8xf32>
    %63 = arith.mulf %53, %61 : vector<1x8xf32>
    %64 = arith.subf %62, %63 : vector<1x8xf32>
    %65 = tpu.concatenate %61, %64 in 0 : vector<1x8xf32>, vector<1x8xf32> -> vector<2x8xf32>
    %cst_30 = arith.constant dense<0.000000e+00> : vector<2x128xf32>
    %66 = tpu.matmul %65, %42, %cst_30 {dimension_numbers = #tpu.dot_dimension_numbers<[1], [0], [0], [1], [0, 0, 1, 1], [], []>} : vector<2x8xf32>, vector<8x128xf32>, vector<2x128xf32> -> vector<2x128xf32>
    %67 = vector.extract_strided_slice %66 {offsets = [0, 0], sizes = [1, 128], strides = [1, 1]} : vector<2x128xf32> to vector<1x128xf32>
    %68 = vector.broadcast %67 : vector<1x128xf32> to vector<2x128xf32>
    %69 = arith.mulf %40, %68 : vector<2x128xf32>
    %70 = vector.extract_strided_slice %66 {offsets = [1, 0], sizes = [1, 128], strides = [1, 1]} : vector<2x128xf32> to vector<1x128xf32>
    %71 = vector.broadcast %70 : vector<1x128xf32> to vector<2x128xf32>
    %72 = arith.addf %69, %71 : vector<2x128xf32>
    %cst_31 = arith.constant 0.000000e+00 : f32
    %73 = vector.broadcast %cst_31 : f32 to vector<2x128xf32>
    %74 = arith.maximumf %72, %73 : vector<2x128xf32>
    %75 = arith.truncf %74 : vector<2x128xf32> to vector<2x128xbf16>
    %c0_32 = arith.constant 0 : index
    %c0_33 = arith.constant 0 : index
    %76 = vector.load %arg9[%c0_32, %c0_33] : memref<128x256xbf16, #tpu.memory_space<vmem>>, vector<128x256xbf16>
    %cst_34 = arith.constant dense<0.000000e+00> : vector<2x256xf32>
    %77 = tpu.matmul %75, %76, %cst_34 {dimension_numbers = #tpu.dot_dimension_numbers<[1], [0], [0], [1], [0, 0, 1, 1], [], []>} : vector<2x128xbf16>, vector<128x256xbf16>, vector<2x256xf32> -> vector<2x256xf32>
    %c0_35 = arith.constant 0 : index
    %c0_36 = arith.constant 0 : index
    %78 = vector.load %arg10[%c0_35, %c0_36] : memref<256x4xf32, #tpu.memory_space<vmem>>, vector<256x4xf32>
    %c0_37 = arith.constant 0 : index
    %c0_38 = arith.constant 0 : index
    %79 = vector.load %arg11[%c0_37, %c0_38] : memref<4x256xf32, #tpu.memory_space<vmem>>, vector<4x256xf32>
    %c0_39 = arith.constant 0 : index
    %c0_40 = arith.constant 0 : index
    %80 = vector.load %arg12[%c0_39, %c0_40] : memref<2x4xf32, #tpu.memory_space<vmem>>, vector<2x4xf32>
    %cst_41 = arith.constant dense<0.000000e+00> : vector<256xf32>
    %81 = vector.multi_reduction <add>, %77, %cst_41 [0] : vector<2x256xf32> to vector<256xf32>
    %82 = vector.shape_cast %81 : vector<256xf32> to vector<1x256xf32>
    %83 = arith.mulf %77, %77 : vector<2x256xf32>
    %cst_42 = arith.constant dense<0.000000e+00> : vector<256xf32>
    %84 = vector.multi_reduction <add>, %83, %cst_42 [0] : vector<2x256xf32> to vector<256xf32>
    %85 = vector.shape_cast %84 : vector<256xf32> to vector<1x256xf32>
    %86 = tpu.concatenate %82, %85 in 0 : vector<1x256xf32>, vector<1x256xf32> -> vector<2x256xf32>
    %cst_43 = arith.constant dense<0.000000e+00> : vector<2x4xf32>
    %87 = tpu.matmul %86, %78, %cst_43 {dimension_numbers = #tpu.dot_dimension_numbers<[1], [0], [0], [1], [0, 0, 1, 1], [], []>} : vector<2x256xf32>, vector<256x4xf32>, vector<2x4xf32> -> vector<2x4xf32>
    %cst_44 = arith.constant 5.000000e-01 : f32
    %88 = vector.broadcast %cst_44 : f32 to vector<2x4xf32>
    %89 = arith.mulf %87, %88 : vector<2x4xf32>
    %90 = vector.extract_strided_slice %89 {offsets = [0, 0], sizes = [1, 4], strides = [1, 1]} : vector<2x4xf32> to vector<1x4xf32>
    %91 = vector.extract_strided_slice %89 {offsets = [1, 0], sizes = [1, 4], strides = [1, 1]} : vector<2x4xf32> to vector<1x4xf32>
    %92 = arith.mulf %90, %90 : vector<1x4xf32>
    %93 = arith.subf %91, %92 : vector<1x4xf32>
    %cst_45 = arith.constant 9.99999974E-6 : f32
    %94 = vector.broadcast %cst_45 : f32 to vector<1x4xf32>
    %95 = arith.addf %93, %94 : vector<1x4xf32>
    %96 = math.rsqrt %95 : vector<1x4xf32>
    %97 = vector.extract_strided_slice %80 {offsets = [0, 0], sizes = [1, 4], strides = [1, 1]} : vector<2x4xf32> to vector<1x4xf32>
    %98 = arith.mulf %97, %96 : vector<1x4xf32>
    %99 = vector.extract_strided_slice %80 {offsets = [1, 0], sizes = [1, 4], strides = [1, 1]} : vector<2x4xf32> to vector<1x4xf32>
    %100 = arith.mulf %90, %98 : vector<1x4xf32>
    %101 = arith.subf %99, %100 : vector<1x4xf32>
    %102 = tpu.concatenate %98, %101 in 0 : vector<1x4xf32>, vector<1x4xf32> -> vector<2x4xf32>
    %cst_46 = arith.constant dense<0.000000e+00> : vector<2x256xf32>
    %103 = tpu.matmul %102, %79, %cst_46 {dimension_numbers = #tpu.dot_dimension_numbers<[1], [0], [0], [1], [0, 0, 1, 1], [], []>} : vector<2x4xf32>, vector<4x256xf32>, vector<2x256xf32> -> vector<2x256xf32>
    %104 = vector.extract_strided_slice %103 {offsets = [0, 0], sizes = [1, 256], strides = [1, 1]} : vector<2x256xf32> to vector<1x256xf32>
    %105 = vector.broadcast %104 : vector<1x256xf32> to vector<2x256xf32>
    %106 = arith.mulf %77, %105 : vector<2x256xf32>
    %107 = vector.extract_strided_slice %103 {offsets = [1, 0], sizes = [1, 256], strides = [1, 1]} : vector<2x256xf32> to vector<1x256xf32>
    %108 = vector.broadcast %107 : vector<1x256xf32> to vector<2x256xf32>
    %109 = arith.addf %106, %108 : vector<2x256xf32>
    %cst_47 = arith.constant 0.000000e+00 : f32
    %110 = vector.broadcast %cst_47 : f32 to vector<2x256xf32>
    %111 = arith.maximumf %109, %110 : vector<2x256xf32>
    %112 = arith.truncf %111 : vector<2x256xf32> to vector<2x256xbf16>
    %c0_48 = arith.constant 0 : index
    %c0_49 = arith.constant 0 : index
    %113 = vector.load %arg13[%c0_48, %c0_49] : memref<256x256xbf16, #tpu.memory_space<vmem>>, vector<256x256xbf16>
    %cst_50 = arith.constant dense<0.000000e+00> : vector<2x256xf32>
    %114 = tpu.matmul %112, %113, %cst_50 {dimension_numbers = #tpu.dot_dimension_numbers<[1], [0], [0], [1], [0, 0, 1, 1], [], []>} : vector<2x256xbf16>, vector<256x256xbf16>, vector<2x256xf32> -> vector<2x256xf32>
    %c0_51 = arith.constant 0 : index
    %c0_52 = arith.constant 0 : index
    %115 = vector.load %arg14[%c0_51, %c0_52] : memref<1x256xf32, #tpu.memory_space<vmem>>, vector<1x256xf32>
    %116 = vector.broadcast %115 : vector<1x256xf32> to vector<2x256xf32>
    %117 = arith.addf %114, %116 : vector<2x256xf32>
    %c0_53 = arith.constant 0 : index
    %c0_54 = arith.constant 0 : index
    %118 = vector.load %arg15[%c0_53, %c0_54] : memref<2x256xf32, #tpu.memory_space<vmem>>, vector<2x256xf32>
    tpu.vector_store %arg15[%c0_53, %c0_54], %117 {strides = array<i32>} : memref<2x256xf32, #tpu.memory_space<vmem>>, vector<2x256xf32>,
    return
  }
}

</mosaic_0001>

<llo_original>
// kernel: forward.1
$region0: #{forward.1}
  #allocation0 [shape = 'u32[]', space=smem, size = 0x4, offset = 0x4, fixed_abs, tag = 'smem constant byte address 0x4 - core index']
  #allocation1 [shape = 'u32[144,128]{1,0:T(1,128)}', space=vmem, size = 0x12000, scoped, tag = 'internal scratch']
  %s0 = inlined_call_operand.vmem [shape: f32[2,32], index: 0, kind: input, shape index: {}]
  %s1 = inlined_call_operand.vmem [shape: bf16[32,128], index: 1, kind: input, shape index: {}]
  %s2 = inlined_call_operand.vmem [shape: f32[128,16], index: 2, kind: input, shape index: {}]
  %s3 = inlined_call_operand.vmem [shape: f32[16,128], index: 3, kind: input, shape index: {}]
  %s4 = inlined_call_operand.vmem [shape: f32[2,16], index: 4, kind: input, shape index: {}]
  %s5 = inlined_call_operand.vmem [shape: bf16[128,128], index: 5, kind: input, shape index: {}]
  %s6 = inlined_call_operand.vmem [shape: f32[128,8], index: 6, kind: input, shape index: {}]
  %s7 = inlined_call_operand.vmem [shape: f32[8,128], index: 7, kind: input, shape index: {}]
  %s8 = inlined_call_operand.vmem [shape: f32[2,8], index: 8, kind: input, shape index: {}]
  %s9 = inlined_call_operand.vmem [shape: bf16[128,256], index: 9, kind: input, shape index: {}]
  %s10 = inlined_call_operand.vmem [shape: f32[256,4], index: 10, kind: input, shape index: {}]
  %s11 = inlined_call_operand.vmem [shape: f32[4,256], index: 11, kind: input, shape index: {}]
  %s12 = inlined_call_operand.vmem [shape: f32[2,4], index: 12, kind: input, shape index: {}]
  %s13 = inlined_call_operand.vmem [shape: bf16[256,256], index: 13, kind: input, shape index: {}]
  %s14 = inlined_call_operand.vmem [shape: f32[1,256], index: 14, kind: input, shape index: {}]
  %s15 = inlined_call_operand.vmem [shape: f32[2,256], index: 15, kind: output, shape index: {}]
  %s16 = sld [smem:[#allocation0]]
  $region70: #{forward.1} parent=0
    _
  %s18 = ssub.s32 1, %s16
  %s19 = scalar_select 0, %s18, %s16
  // Predicated region
  $region2: #{forward.1} parent=0 // pred_check
    _
  $region3: #{forward.1} parent=0 // pred_check_branch
    %21 = sbr.rel (0) target = $region5
  $region4: #{forward.1} parent=0 // pred_region
    _
  $region5: #{forward.1} parent=0 // pred_fallthru
    _
  // Predicated region
  $region6: #{forward.1} parent=0 // pred_check
    _
  $region7: #{forward.1} parent=0 // pred_check_branch
    %23 = sbr.rel (0) target = $region9
  $region8: #{forward.1} parent=0 // pred_region
    _
  $region9: #{forward.1} parent=0 // pred_fallthru
    _
  // Predicated region
  $region10: #{forward.1} parent=0 // pred_check
    _
  $region11: #{forward.1} parent=0 // pred_check_branch
    %25 = sbr.rel (0) target = $region13
  $region12: #{forward.1} parent=0 // pred_region
    _
  $region13: #{forward.1} parent=0 // pred_fallthru
    _
  // Predicated region
  $region14: #{forward.1} parent=0 // pred_check
    _
  $region15: #{forward.1} parent=0 // pred_check_branch
    %27 = sbr.rel (0) target = $region17
  $region16: #{forward.1} parent=0 // pred_region
    _
  $region17: #{forward.1} parent=0 // pred_fallthru
    _
  // Predicated region
  $region18: #{forward.1} parent=0 // pred_check
    _
  $region19: #{forward.1} parent=0 // pred_check_branch
    %29 = sbr.rel (0) target = $region21
  $region20: #{forward.1} parent=0 // pred_region
    _
  $region21: #{forward.1} parent=0 // pred_fallthru
    _
  // Predicated region
  $region22: #{forward.1} parent=0 // pred_check
    _
  $region23: #{forward.1} parent=0 // pred_check_branch
    %31 = sbr.rel (0) target = $region25
  $region24: #{forward.1} parent=0 // pred_region
    _
  $region25: #{forward.1} parent=0 // pred_fallthru
    _
  // Predicated region
  $region26: #{forward.1} parent=0 // pred_check
    _
  $region27: #{forward.1} parent=0 // pred_check_branch
    %33 = sbr.rel (0) target = $region29
  $region28: #{forward.1} parent=0 // pred_region
    _
  $region29: #{forward.1} parent=0 // pred_fallthru
    _
  // Predicated region
  $region30: #{forward.1} parent=0 // pred_check
    _
  $region31: #{forward.1} parent=0 // pred_check_branch
    %35 = sbr.rel (0) target = $region33
  $region32: #{forward.1} parent=0 // pred_region
    _
  $region33: #{forward.1} parent=0 // pred_fallthru
    _
  // Predicated region
  $region34: #{forward.1} parent=0 // pred_check
    _
  $region35: #{forward.1} parent=0 // pred_check_branch
    %37 = sbr.rel (0) target = $region37
  $region36: #{forward.1} parent=0 // pred_region
    _
  $region37: #{forward.1} parent=0 // pred_fallthru
    _
  // Predicated region
  $region38: #{forward.1} parent=0 // pred_check
    _
  $region39: #{forward.1} parent=0 // pred_check_branch
    %39 = sbr.rel (0) target = $region41
  $region40: #{forward.1} parent=0 // pred_region
    _
  $region41: #{forward.1} parent=0 // pred_fallthru
    _
  // Predicated region
  $region42: #{forward.1} parent=0 // pred_check
    _
  $region43: #{forward.1} parent=0 // pred_check_branch
    %41 = sbr.rel (0) target = $region45
  $region44: #{forward.1} parent=0 // pred_region
    _
  $region45: #{forward.1} parent=0 // pred_fallthru
    _
  // Predicated region
  $region46: #{forward.1} parent=0 // pred_check
    _
  $region47: #{forward.1} parent=0 // pred_check_branch
    %43 = sbr.rel (0) target = $region49
  $region48: #{forward.1} parent=0 // pred_region
    _
  $region49: #{forward.1} parent=0 // pred_fallthru
    _
  // Predicated region
  $region50: #{forward.1} parent=0 // pred_check
    _
  $region51: #{forward.1} parent=0 // pred_check_branch
    %45 = sbr.rel (0) target = $region53
  $region52: #{forward.1} parent=0 // pred_region
    _
  $region53: #{forward.1} parent=0 // pred_fallthru
    _
  // Predicated region
  $region54: #{forward.1} parent=0 // pred_check
    _
  $region55: #{forward.1} parent=0 // pred_check_branch
    %47 = sbr.rel (0) target = $region57
  $region56: #{forward.1} parent=0 // pred_region
    _
  $region57: #{forward.1} parent=0 // pred_fallthru
    _
  // Predicated region
  $region58: #{forward.1} parent=0 // pred_check
    _
  $region59: #{forward.1} parent=0 // pred_check_branch
    %49 = sbr.rel (0) target = $region61
  $region60: #{forward.1} parent=0 // pred_region
    _
  $region61: #{forward.1} parent=0 // pred_fallthru
    _
  %v51 = vld [vmem:[%s0] sm:$0x3]
  %v52 = vpack.c.bf16 %v51, %v51
  %v53 = vld [vmem:[%s1] sm:$0xf]
  %v54 = vld [vmem:[%s1 + $0x4] sm:$0xf]
  %v55 = vld [vmem:[%s1 + $0x8] sm:$0xf]
  %v56 = vld [vmem:[%s1 + $0xc] sm:$0xf]
  %v61 = vunpack.c.l.b16 %v53
  %v62 = vunpack.c.l.b16 %v54
  %v63 = vunpack.c.l.b16 %v55
  %v64 = vunpack.c.l.b16 %v56
  %v65 = vpack.c.b16 %v62, %v61
  %v66 = vpack.c.b16 %v64, %v63
  %vm69 = vcmask 261120
  %v71 = vsel %vm69, %v52, 0
  %73 = vmatprep.subr.bf16.mxu0 0
  %74 = vmatpush1.bf16.msra.mxu0 %v65
  %75 = vmatprep.subr.bf16.mxu0 0
  %76 = vmatpush1.bf16.msra.mxu0 %v66
  %77 = vmatprep.subr.bf16.mxu0 0
  %78 = vmatpush1.bf16.msra.mxu0 0
  %79 = vmatprep.subr.bf16.mxu0 0
  %80 = vmatpush1.bf16.msra.mxu0 0
  %81 = vmatprep.subr.bf16.mxu0 0
  %82 = vmatpush1.bf16.msra.mxu0 0
  %83 = vmatprep.subr.bf16.mxu0 0
  %84 = vmatpush1.bf16.msra.mxu0 0
  %85 = vmatprep.subr.bf16.mxu0 0
  %86 = vmatpush1.bf16.msra.mxu0 0
  %87 = vmatprep.subr.bf16.mxu0 0
  %88 = vmatpush1.bf16.msra.mxu0 0
  %89 = vmatprep.subr.bf16.mxu0 0
  %90 = vmatpush1.bf16.msra.mxu0 0
  %91 = vmatprep.subr.bf16.mxu0 0
  %92 = vmatpush1.bf16.msra.mxu0 0
  %93 = vmatprep.subr.bf16.mxu0 0
  %94 = vmatpush1.bf16.msra.mxu0 0
  %95 = vmatprep.subr.bf16.mxu0 0
  %96 = vmatpush1.bf16.msra.mxu0 0
  %97 = vmatprep.subr.bf16.mxu0 0
  %98 = vmatpush1.bf16.msra.mxu0 0
  %99 = vmatprep.subr.bf16.mxu0 0
  %100 = vmatpush1.bf16.msra.mxu0 0
  %101 = vmatprep.subr.bf16.mxu0 0
  %102 = vmatpush1.bf16.msra.mxu0 0
  %103 = vmatprep.subr.bf16.mxu0 0
  %104 = vmatpush1.bf16.msra.mxu0 0
  %105 = vmatprep.mubr.bf16.mxu0 0
  %106 = vmatmul.mubr.bf16.gmra.mrb[0].mxu0 %v71
  %v107 = vpop.f32.mrb[0].mxu0
  %v108 = vadd.f32 0.0, %v107
  %v109 = vpop.f32.mrb[0].mxu0
  %v110 = vpop.f32.mrb[0].mxu0
  %v111 = vpop.f32.mrb[0].mxu0
  %112 = vdwg.mxu0
  %v113 = vld [vmem:[%s2] sm:$0xff]
  %v114 = vld [vmem:[%s2 + $0x8] sm:$0xff]
  %v115 = vld [vmem:[%s2 + $0x10] sm:$0xff]
  %v116 = vld [vmem:[%s2 + $0x18] sm:$0xff]
  %v117 = vld [vmem:[%s2 + $0x20] sm:$0xff]
  %v118 = vld [vmem:[%s2 + $0x28] sm:$0xff]
  %v119 = vld [vmem:[%s2 + $0x30] sm:$0xff]
  %v120 = vld [vmem:[%s2 + $0x38] sm:$0xff]
  %v121 = vld [vmem:[%s2 + $0x40] sm:$0xff]
  %v122 = vld [vmem:[%s2 + $0x48] sm:$0xff]
  %v123 = vld [vmem:[%s2 + $0x50] sm:$0xff]
  %v124 = vld [vmem:[%s2 + $0x58] sm:$0xff]
  %v125 = vld [vmem:[%s2 + $0x60] sm:$0xff]
  %v126 = vld [vmem:[%s2 + $0x68] sm:$0xff]
  %v127 = vld [vmem:[%s2 + $0x70] sm:$0xff]
  %v128 = vld [vmem:[%s2 + $0x78] sm:$0xff]
  %v129 = vld [vmem:[%s3] sm:$0xff]
  %v130 = vld [vmem:[%s3 + $0x8] sm:$0xff]
  %v131 = vld [vmem:[%s4] sm:$0x3]
  %vm132 = vcmask 1041408
  %v133 = vsel %vm132, %v108, 0.0
  %v134 = vrot.slane %v133, 4
  %v135 = vadd.f32 %v133, %v134
  %v136 = vrot.slane %v135, 2
  %v137 = vadd.f32 %v135, %v136
  %v138 = vrot.slane %v137, 1
  %v139 = vadd.f32 %v137, %v138
  %v140 = vmul.f32 %v108, %v108
  %v141 = vsel %vm132, %v140, 0.0
  %v142 = vrot.slane %v141, 4
  %v143 = vadd.f32 %v141, %v142
  %v144 = vrot.slane %v143, 2
  %v145 = vadd.f32 %v143, %v144
  %v146 = vrot.slane %v145, 1
  %v147 = vadd.f32 %v145, %v146
  %vm148 = vcmask 1040384
  %v149 = vsel %vm148, %v139, %v147
  %150 = vmatprep.subr.mxu0 0.0
  %151 = vmatpush1.msra.mxu0 %v113
  %152 = vmatprep.subr.mxu0 0.0
  %153 = vmatpush1.msra.mxu0 %v114
  %154 = vmatprep.subr.mxu0 0.0
  %155 = vmatpush1.msra.mxu0 %v115
  %156 = vmatprep.subr.mxu0 0.0
  %157 = vmatpush1.msra.mxu0 %v116
  %158 = vmatprep.subr.mxu0 0.0
  %159 = vmatpush1.msra.mxu0 %v117
  %160 = vmatprep.subr.mxu0 0.0
  %161 = vmatpush1.msra.mxu0 %v118
  %162 = vmatprep.subr.mxu0 0.0
  %163 = vmatpush1.msra.mxu0 %v119
  %164 = vmatprep.subr.mxu0 0.0
  %165 = vmatpush1.msra.mxu0 %v120
  %166 = vmatprep.subr.mxu0 0.0
  %167 = vmatpush1.msra.mxu0 %v121
  %168 = vmatprep.subr.mxu0 0.0
  %169 = vmatpush1.msra.mxu0 %v122
  %170 = vmatprep.subr.mxu0 0.0
  %171 = vmatpush1.msra.mxu0 %v123
  %172 = vmatprep.subr.mxu0 0.0
  %173 = vmatpush1.msra.mxu0 %v124
  %174 = vmatprep.subr.mxu0 0.0
  %175 = vmatpush1.msra.mxu0 %v125
  %176 = vmatprep.subr.mxu0 0.0
  %177 = vmatpush1.msra.mxu0 %v126
  %178 = vmatprep.subr.mxu0 0.0
  %179 = vmatpush1.msra.mxu0 %v127
  %180 = vmatprep.subr.mxu0 0.0
  %181 = vmatpush1.msra.mxu0 %v128
  %182 = vmatprep.subr.mxu0 0.0
  %183 = vmatpush1.msra.mxu0 0.0
  %184 = vmatprep.subr.mxu0 0.0
  %185 = vmatpush1.msra.mxu0 0.0
  %186 = vmatprep.subr.mxu0 0.0
  %187 = vmatpush1.msra.mxu0 0.0
  %188 = vmatprep.subr.mxu0 0.0
  %189 = vmatpush1.msra.mxu0 0.0
  %190 = vmatprep.subr.mxu0 0.0
  %191 = vmatpush1.msra.mxu0 0.0
  %192 = vmatprep.subr.mxu0 0.0
  %193 = vmatpush1.msra.mxu0 0.0
  %194 = vmatprep.subr.mxu0 0.0
  %195 = vmatpush1.msra.mxu0 0.0
  %196 = vmatprep.subr.mxu0 0.0
  %197 = vmatpush1.msra.mxu0 0.0
  %198 = vmatprep.subr.mxu0 0.0
  %199 = vmatpush1.msra.mxu0 0.0
  %200 = vmatprep.subr.mxu0 0.0
  %201 = vmatpush1.msra.mxu0 0.0
  %202 = vmatprep.subr.mxu0 0.0
  %203 = vmatpush1.msra.mxu0 0.0
  %204 = vmatprep.subr.mxu0 0.0
  %205 = vmatpush1.msra.mxu0 0.0
  %206 = vmatprep.subr.mxu0 0.0
  %207 = vmatpush1.msra.mxu0 0.0
  %208 = vmatprep.subr.mxu0 0.0
  %209 = vmatpush1.msra.mxu0 0.0
  %210 = vmatprep.subr.mxu0 0.0
  %211 = vmatpush1.msra.mxu0 0.0
  %212 = vmatprep.subr.mxu0 0.0
  %213 = vmatpush1.msra.mxu0 0.0
  %214 = vmatprep.mubr.f32.mxu0 0.0
  %215 = vmatmul.mubr.f32.gmra.mrb[0].mxu0 %v149
  %v216 = vpop.f32.mrb[0].mxu0
  %v217 = vadd.f32 0.0, %v216
  %v218 = vpop.f32.mrb[0].mxu0
  %219 = vdwg.mxu0
  %v220 = vmul.f32 %v217, 0.5
  %v221 = vmul.f32 %v220, %v220
  %v223 = vrot.slane %v221, 7
  %v225 = vsub.f32 %v220, %v223
  %v226 = vadd.f32 %v225, 1e-05
  %v227 = vrsqrt.pop %v226
  %v229 = vrot.slane %v227, 1
  %v231 = vmul.f32 %v131, %v229
  %v232 = vmul.f32 %v220, %v231
  %v234 = vrot.slane %v232, 7
  %v236 = vsub.f32 %v131, %v234
  %v237 = vsel %vm148, %v231, %v236
  %vm238 = vcmask 130048
  %v240 = vsel %vm238, %v237, 0
  %242 = vmatprep.subr.mxu0 0.0
  %243 = vmatpush1.msra.mxu0 %v129
  %244 = vmatprep.subr.mxu0 0.0
  %245 = vmatpush1.msra.mxu0 %v130
  %246 = vmatprep.subr.mxu0 0.0
  %247 = vmatpush1.msra.mxu0 0.0
  %248 = vmatprep.subr.mxu0 0.0
  %249 = vmatpush1.msra.mxu0 0.0
  %250 = vmatprep.subr.mxu0 0.0
  %251 = vmatpush1.msra.mxu0 0.0
  %252 = vmatprep.subr.mxu0 0.0
  %253 = vmatpush1.msra.mxu0 0.0
  %254 = vmatprep.subr.mxu0 0.0
  %255 = vmatpush1.msra.mxu0 0.0
  %256 = vmatprep.subr.mxu0 0.0
  %257 = vmatpush1.msra.mxu0 0.0
  %258 = vmatprep.subr.mxu0 0.0
  %259 = vmatpush1.msra.mxu0 0.0
  %260 = vmatprep.subr.mxu0 0.0
  %261 = vmatpush1.msra.mxu0 0.0
  %262 = vmatprep.subr.mxu0 0.0
  %263 = vmatpush1.msra.mxu0 0.0
  %264 = vmatprep.subr.mxu0 0.0
  %265 = vmatpush1.msra.mxu0 0.0
  %266 = vmatprep.subr.mxu0 0.0
  %267 = vmatpush1.msra.mxu0 0.0
  %268 = vmatprep.subr.mxu0 0.0
  %269 = vmatpush1.msra.mxu0 0.0
  %270 = vmatprep.subr.mxu0 0.0
  %271 = vmatpush1.msra.mxu0 0.0
  %272 = vmatprep.subr.mxu0 0.0
  %273 = vmatpush1.msra.mxu0 0.0
  %274 = vmatprep.subr.mxu0 0.0
  %275 = vmatpush1.msra.mxu0 0.0
  %276 = vmatprep.subr.mxu0 0.0
  %277 = vmatpush1.msra.mxu0 0.0
  %278 = vmatprep.subr.mxu0 0.0
  %279 = vmatpush1.msra.mxu0 0.0
  %280 = vmatprep.subr.mxu0 0.0
  %281 = vmatpush1.msra.mxu0 0.0
  %282 = vmatprep.subr.mxu0 0.0
  %283 = vmatpush1.msra.mxu0 0.0
  %284 = vmatprep.subr.mxu0 0.0
  %285 = vmatpush1.msra.mxu0 0.0
  %286 = vmatprep.subr.mxu0 0.0
  %287 = vmatpush1.msra.mxu0 0.0
  %288 = vmatprep.subr.mxu0 0.0
  %289 = vmatpush1.msra.mxu0 0.0
  %290 = vmatprep.subr.mxu0 0.0
  %291 = vmatpush1.msra.mxu0 0.0
  %292 = vmatprep.subr.mxu0 0.0
  %293 = vmatpush1.msra.mxu0 0.0
  %294 = vmatprep.subr.mxu0 0.0
  %295 = vmatpush1.msra.mxu0 0.0
  %296 = vmatprep.subr.mxu0 0.0
  %297 = vmatpush1.msra.mxu0 0.0
  %298 = vmatprep.subr.mxu0 0.0
  %299 = vmatpush1.msra.mxu0 0.0
  %300 = vmatprep.subr.mxu0 0.0
  %301 = vmatpush1.msra.mxu0 0.0
  %302 = vmatprep.subr.mxu0 0.0
  %303 = vmatpush1.msra.mxu0 0.0
  %304 = vmatprep.subr.mxu0 0.0
  %305 = vmatpush1.msra.mxu0 0.0
  %306 = vmatprep.mubr.f32.mxu0 0.0
  %307 = vmatmul.mubr.f32.gmra.mrb[0].mxu0 %v240
  %v308 = vpop.f32.mrb[0].mxu0
  %v309 = vadd.f32 0.0, %v308
  %v310 = vpop.f32.mrb[0].mxu0
  %311 = vdwg.mxu0
  %v312 = vlaneseq
  %v313 = vshrl.u32 %v312, 7
  %v314 = vsub.s32 0, %v313
  %v315 = vrot.slane %v309, %v314
  %v316 = vmul.f32 %v108, %v315
  %v317 = vlaneseq
  %v318 = vshrl.u32 %v317, 7
  %v319 = vsub.s32 1, %v318
  %v320 = vrot.slane %v309, %v319
  %v321 = vadd.f32 %v316, %v320
  %v322 = vmax.f32 %v321, 0.0
  %v323 = vpack.c.bf16 %v322, %v322
  %v324 = vld [vmem:[%s5] sm:$0xf]
  %v325 = vld [vmem:[%s5 + $0x4] sm:$0xf]
  %v326 = vld [vmem:[%s5 + $0x8] sm:$0xf]
  %v327 = vld [vmem:[%s5 + $0xc] sm:$0xf]
  %v328 = vld [vmem:[%s5 + $0x10] sm:$0xf]
  %v329 = vld [vmem:[%s5 + $0x14] sm:$0xf]
  %v330 = vld [vmem:[%s5 + $0x18] sm:$0xf]
  %v331 = vld [vmem:[%s5 + $0x1c] sm:$0xf]
  %v332 = vld [vmem:[%s5 + $0x20] sm:$0xf]
  %v333 = vld [vmem:[%s5 + $0x24] sm:$0xf]
  %v334 = vld [vmem:[%s5 + $0x28] sm:$0xf]
  %v335 = vld [vmem:[%s5 + $0x2c] sm:$0xf]
  %v336 = vld [vmem:[%s5 + $0x30] sm:$0xf]
  %v337 = vld [vmem:[%s5 + $0x34] sm:$0xf]
  %v338 = vld [vmem:[%s5 + $0x38] sm:$0xf]
  %v339 = vld [vmem:[%s5 + $0x3c] sm:$0xf]
  %v356 = vunpack.c.l.b16 %v324
  %v357 = vunpack.c.l.b16 %v325
  %v358 = vunpack.c.l.b16 %v326
  %v359 = vunpack.c.l.b16 %v327
  %v360 = vunpack.c.l.b16 %v328
  %v361 = vunpack.c.l.b16 %v329
  %v362 = vunpack.c.l.b16 %v330
  %v363 = vunpack.c.l.b16 %v331
  %v364 = vunpack.c.l.b16 %v332
  %v365 = vunpack.c.l.b16 %v333
  %v366 = vunpack.c.l.b16 %v334
  %v367 = vunpack.c.l.b16 %v335
  %v368 = vunpack.c.l.b16 %v336
  %v369 = vunpack.c.l.b16 %v337
  %v370 = vunpack.c.l.b16 %v338
  %v371 = vunpack.c.l.b16 %v339
  %v372 = vpack.c.b16 %v357, %v356
  %v373 = vpack.c.b16 %v359, %v358
  %v374 = vpack.c.b16 %v361, %v360
  %v375 = vpack.c.b16 %v363, %v362
  %v376 = vpack.c.b16 %v365, %v364
  %v377 = vpack.c.b16 %v367, %v366
  %v378 = vpack.c.b16 %v369, %v368
  %v379 = vpack.c.b16 %v371, %v370
  %388 = vmatprep.subr.bf16.mxu0 0
  %389 = vmatpush1.bf16.msra.mxu0 %v372
  %390 = vmatprep.subr.bf16.mxu0 0
  %391 = vmatpush1.bf16.msra.mxu0 %v373
  %392 = vmatprep.subr.bf16.mxu0 0
  %393 = vmatpush1.bf16.msra.mxu0 %v374
  %394 = vmatprep.subr.bf16.mxu0 0
  %395 = vmatpush1.bf16.msra.mxu0 %v375
  %396 = vmatprep.subr.bf16.mxu0 0
  %397 = vmatpush1.bf16.msra.mxu0 %v376
  %398 = vmatprep.subr.bf16.mxu0 0
  %399 = vmatpush1.bf16.msra.mxu0 %v377
  %400 = vmatprep.subr.bf16.mxu0 0
  %401 = vmatpush1.bf16.msra.mxu0 %v378
  %402 = vmatprep.subr.bf16.mxu0 0
  %403 = vmatpush1.bf16.msra.mxu0 %v379
  %404 = vmatprep.subr.bf16.mxu0 0
  %405 = vmatpush1.bf16.msra.mxu0 0
  %406 = vmatprep.subr.bf16.mxu0 0
  %407 = vmatpush1.bf16.msra.mxu0 0
  %408 = vmatprep.subr.bf16.mxu0 0
  %409 = vmatpush1.bf16.msra.mxu0 0
  %410 = vmatprep.subr.bf16.mxu0 0
  %411 = vmatpush1.bf16.msra.mxu0 0
  %412 = vmatprep.subr.bf16.mxu0 0
  %413 = vmatpush1.bf16.msra.mxu0 0
  %414 = vmatprep.subr.bf16.mxu0 0
  %415 = vmatpush1.bf16.msra.mxu0 0
  %416 = vmatprep.subr.bf16.mxu0 0
  %417 = vmatpush1.bf16.msra.mxu0 0
  %418 = vmatprep.subr.bf16.mxu0 0
  %419 = vmatpush1.bf16.msra.mxu0 0
  %420 = vmatprep.mubr.bf16.mxu0 0
  %421 = vmatmul.mubr.bf16.gmra.mrb[0].mxu0 %v323
  %v422 = vpop.f32.mrb[0].mxu0
  %v423 = vadd.f32 0.0, %v422
  %v424 = vpop.f32.mrb[0].mxu0
  %v425 = vpop.f32.mrb[0].mxu0
  %v426 = vpop.f32.mrb[0].mxu0
  %427 = vdwg.mxu0
  %v428 = vld [vmem:[%s6] sm:$0xff]
  %v429 = vld [vmem:[%s6 + $0x8] sm:$0xff]
  %v430 = vld [vmem:[%s6 + $0x10] sm:$0xff]
  %v431 = vld [vmem:[%s6 + $0x18] sm:$0xff]
  %v432 = vld [vmem:[%s6 + $0x20] sm:$0xff]
  %v433 = vld [vmem:[%s6 + $0x28] sm:$0xff]
  %v434 = vld [vmem:[%s6 + $0x30] sm:$0xff]
  %v435 = vld [vmem:[%s6 + $0x38] sm:$0xff]
  %v436 = vld [vmem:[%s6 + $0x40] sm:$0xff]
  %v437 = vld [vmem:[%s6 + $0x48] sm:$0xff]
  %v438 = vld [vmem:[%s6 + $0x50] sm:$0xff]
  %v439 = vld [vmem:[%s6 + $0x58] sm:$0xff]
  %v440 = vld [vmem:[%s6 + $0x60] sm:$0xff]
  %v441 = vld [vmem:[%s6 + $0x68] sm:$0xff]
  %v442 = vld [vmem:[%s6 + $0x70] sm:$0xff]
  %v443 = vld [vmem:[%s6 + $0x78] sm:$0xff]
  %v444 = vld [vmem:[%s7] sm:$0xff]
  %v445 = vld [vmem:[%s8] sm:$0x3]
  %v446 = vsel %vm132, %v423, 0.0
  %v447 = vrot.slane %v446, 4
  %v448 = vadd.f32 %v446, %v447
  %v449 = vrot.slane %v448, 2
  %v450 = vadd.f32 %v448, %v449
  %v451 = vrot.slane %v450, 1
  %v452 = vadd.f32 %v450, %v451
  %v453 = vmul.f32 %v423, %v423
  %v454 = vsel %vm132, %v453, 0.0
  %v455 = vrot.slane %v454, 4
  %v456 = vadd.f32 %v454, %v455
  %v457 = vrot.slane %v456, 2
  %v458 = vadd.f32 %v456, %v457
  %v459 = vrot.slane %v458, 1
  %v460 = vadd.f32 %v458, %v459
  %v461 = vsel %vm148, %v452, %v460
  %462 = vmatprep.subr.mxu0 0.0
  %463 = vmatpush1.msra.mxu0 %v428
  %464 = vmatprep.subr.mxu0 0.0
  %465 = vmatpush1.msra.mxu0 %v429
  %466 = vmatprep.subr.mxu0 0.0
  %467 = vmatpush1.msra.mxu0 %v430
  %468 = vmatprep.subr.mxu0 0.0
  %469 = vmatpush1.msra.mxu0 %v431
  %470 = vmatprep.subr.mxu0 0.0
  %471 = vmatpush1.msra.mxu0 %v432
  %472 = vmatprep.subr.mxu0 0.0
  %473 = vmatpush1.msra.mxu0 %v433
  %474 = vmatprep.subr.mxu0 0.0
  %475 = vmatpush1.msra.mxu0 %v434
  %476 = vmatprep.subr.mxu0 0.0
  %477 = vmatpush1.msra.mxu0 %v435
  %478 = vmatprep.subr.mxu0 0.0
  %479 = vmatpush1.msra.mxu0 %v436
  %480 = vmatprep.subr.mxu0 0.0
  %481 = vmatpush1.msra.mxu0 %v437
  %482 = vmatprep.subr.mxu0 0.0
  %483 = vmatpush1.msra.mxu0 %v438
  %484 = vmatprep.subr.mxu0 0.0
  %485 = vmatpush1.msra.mxu0 %v439
  %486 = vmatprep.subr.mxu0 0.0
  %487 = vmatpush1.msra.mxu0 %v440
  %488 = vmatprep.subr.mxu0 0.0
  %489 = vmatpush1.msra.mxu0 %v441
  %490 = vmatprep.subr.mxu0 0.0
  %491 = vmatpush1.msra.mxu0 %v442
  %492 = vmatprep.subr.mxu0 0.0
  %493 = vmatpush1.msra.mxu0 %v443
  %494 = vmatprep.subr.mxu0 0.0
  %495 = vmatpush1.msra.mxu0 0.0
  %496 = vmatprep.subr.mxu0 0.0
  %497 = vmatpush1.msra.mxu0 0.0
  %498 = vmatprep.subr.mxu0 0.0
  %499 = vmatpush1.msra.mxu0 0.0
  %500 = vmatprep.subr.mxu0 0.0
  %501 = vmatpush1.msra.mxu0 0.0
  %502 = vmatprep.subr.mxu0 0.0
  %503 = vmatpush1.msra.mxu0 0.0
  %504 = vmatprep.subr.mxu0 0.0
  %505 = vmatpush1.msra.mxu0 0.0
  %506 = vmatprep.subr.mxu0 0.0
  %507 = vmatpush1.msra.mxu0 0.0
  %508 = vmatprep.subr.mxu0 0.0
  %509 = vmatpush1.msra.mxu0 0.0
  %510 = vmatprep.subr.mxu0 0.0
  %511 = vmatpush1.msra.mxu0 0.0
  %512 = vmatprep.subr.mxu0 0.0
  %513 = vmatpush1.msra.mxu0 0.0
  %514 = vmatprep.subr.mxu0 0.0
  %515 = vmatpush1.msra.mxu0 0.0
  %516 = vmatprep.subr.mxu0 0.0
  %517 = vmatpush1.msra.mxu0 0.0
  %518 = vmatprep.subr.mxu0 0.0
  %519 = vmatpush1.msra.mxu0 0.0
  %520 = vmatprep.subr.mxu0 0.0
  %521 = vmatpush1.msra.mxu0 0.0
  %522 = vmatprep.subr.mxu0 0.0
  %523 = vmatpush1.msra.mxu0 0.0
  %524 = vmatprep.subr.mxu0 0.0
  %525 = vmatpush1.msra.mxu0 0.0
  %526 = vmatprep.mubr.f32.mxu0 0.0
  %527 = vmatmul.mubr.f32.gmra.mrb[0].mxu0 %v461
  %v528 = vpop.f32.mrb[0].mxu0
  %v529 = vadd.f32 0.0, %v528
  %v530 = vpop.f32.mrb[0].mxu0
  %531 = vdwg.mxu0
  %v532 = vmul.f32 %v529, 0.5
  %v533 = vmul.f32 %v532, %v532
  %v535 = vrot.slane %v533, 7
  %v537 = vsub.f32 %v532, %v535
  %v538 = vadd.f32 %v537, 1e-05
  %v539 = vrsqrt.pop %v538
  %v541 = vrot.slane %v539, 1
  %v543 = vmul.f32 %v445, %v541
  %v544 = vmul.f32 %v532, %v543
  %v546 = vrot.slane %v544, 7
  %v548 = vsub.f32 %v445, %v546
  %v549 = vsel %vm148, %v543, %v548
  %vm550 = vcmask 64512
  %v552 = vsel %vm550, %v549, 0
  %554 = vmatprep.subr.mxu0 0.0
  %555 = vmatpush1.msra.mxu0 %v444
  %556 = vmatprep.subr.mxu0 0.0
  %557 = vmatpush1.msra.mxu0 0.0
  %558 = vmatprep.subr.mxu0 0.0
  %559 = vmatpush1.msra.mxu0 0.0
  %560 = vmatprep.subr.mxu0 0.0
  %561 = vmatpush1.msra.mxu0 0.0
  %562 = vmatprep.subr.mxu0 0.0
  %563 = vmatpush1.msra.mxu0 0.0
  %564 = vmatprep.subr.mxu0 0.0
  %565 = vmatpush1.msra.mxu0 0.0
  %566 = vmatprep.subr.mxu0 0.0
  %567 = vmatpush1.msra.mxu0 0.0
  %568 = vmatprep.subr.mxu0 0.0
  %569 = vmatpush1.msra.mxu0 0.0
  %570 = vmatprep.subr.mxu0 0.0
  %571 = vmatpush1.msra.mxu0 0.0
  %572 = vmatprep.subr.mxu0 0.0
  %573 = vmatpush1.msra.mxu0 0.0
  %574 = vmatprep.subr.mxu0 0.0
  %575 = vmatpush1.msra.mxu0 0.0
  %576 = vmatprep.subr.mxu0 0.0
  %577 = vmatpush1.msra.mxu0 0.0
  %578 = vmatprep.subr.mxu0 0.0
  %579 = vmatpush1.msra.mxu0 0.0
  %580 = vmatprep.subr.mxu0 0.0
  %581 = vmatpush1.msra.mxu0 0.0
  %582 = vmatprep.subr.mxu0 0.0
  %583 = vmatpush1.msra.mxu0 0.0
  %584 = vmatprep.subr.mxu0 0.0
  %585 = vmatpush1.msra.mxu0 0.0
  %586 = vmatprep.subr.mxu0 0.0
  %587 = vmatpush1.msra.mxu0 0.0
  %588 = vmatprep.subr.mxu0 0.0
  %589 = vmatpush1.msra.mxu0 0.0
  %590 = vmatprep.subr.mxu0 0.0
  %591 = vmatpush1.msra.mxu0 0.0
  %592 = vmatprep.subr.mxu0 0.0
  %593 = vmatpush1.msra.mxu0 0.0
  %594 = vmatprep.subr.mxu0 0.0
  %595 = vmatpush1.msra.mxu0 0.0
  %596 = vmatprep.subr.mxu0 0.0
  %597 = vmatpush1.msra.mxu0 0.0
  %598 = vmatprep.subr.mxu0 0.0
  %599 = vmatpush1.msra.mxu0 0.0
  %600 = vmatprep.subr.mxu0 0.0
  %601 = vmatpush1.msra.mxu0 0.0
  %602 = vmatprep.subr.mxu0 0.0
  %603 = vmatpush1.msra.mxu0 0.0
  %604 = vmatprep.subr.mxu0 0.0
  %605 = vmatpush1.msra.mxu0 0.0
  %606 = vmatprep.subr.mxu0 0.0
  %607 = vmatpush1.msra.mxu0 0.0
  %608 = vmatprep.subr.mxu0 0.0
  %609 = vmatpush1.msra.mxu0 0.0
  %610 = vmatprep.subr.mxu0 0.0
  %611 = vmatpush1.msra.mxu0 0.0
  %612 = vmatprep.subr.mxu0 0.0
  %613 = vmatpush1.msra.mxu0 0.0
  %614 = vmatprep.subr.mxu0 0.0
  %615 = vmatpush1.msra.mxu0 0.0
  %616 = vmatprep.subr.mxu0 0.0
  %617 = vmatpush1.msra.mxu0 0.0
  %618 = vmatprep.mubr.f32.mxu0 0.0
  %619 = vmatmul.mubr.f32.gmra.mrb[0].mxu0 %v552
  %v620 = vpop.f32.mrb[0].mxu0
  %v621 = vadd.f32 0.0, %v620
  %v622 = vpop.f32.mrb[0].mxu0
  %623 = vdwg.mxu0
  %v624 = vlaneseq
  %v625 = vshrl.u32 %v624, 7
  %v626 = vsub.s32 0, %v625
  %v627 = vrot.slane %v621, %v626
  %v628 = vmul.f32 %v423, %v627
  %v629 = vlaneseq
  %v630 = vshrl.u32 %v629, 7
  %v631 = vsub.s32 1, %v630
  %v632 = vrot.slane %v621, %v631
  %v633 = vadd.f32 %v628, %v632
  %v634 = vmax.f32 %v633, 0.0
  %v635 = vpack.c.bf16 %v634, %v634
  %v636 = vld [vmem:[%s9] sm:$0xff]
  %v637 = vld [vmem:[%s9 + $0x8] sm:$0xff]
  %v638 = vld [vmem:[%s9 + $0x10] sm:$0xff]
  %v639 = vld [vmem:[%s9 + $0x18] sm:$0xff]
  %v640 = vld [vmem:[%s9 + $0x20] sm:$0xff]
  %v641 = vld [vmem:[%s9 + $0x28] sm:$0xff]
  %v642 = vld [vmem:[%s9 + $0x30] sm:$0xff]
  %v643 = vld [vmem:[%s9 + $0x38] sm:$0xff]
  %v644 = vld [vmem:[%s9 + $0x40] sm:$0xff]
  %v645 = vld [vmem:[%s9 + $0x48] sm:$0xff]
  %v646 = vld [vmem:[%s9 + $0x50] sm:$0xff]
  %v647 = vld [vmem:[%s9 + $0x58] sm:$0xff]
  %v648 = vld [vmem:[%s9 + $0x60] sm:$0xff]
  %v649 = vld [vmem:[%s9 + $0x68] sm:$0xff]
  %v650 = vld [vmem:[%s9 + $0x70] sm:$0xff]
  %v651 = vld [vmem:[%s9 + $0x78] sm:$0xff]
  %v668 = vunpack.c.l.b16 %v636
  %v669 = vunpack.c.h.b16 %v636
  %v670 = vunpack.c.l.b16 %v637
  %v671 = vunpack.c.h.b16 %v637
  %v672 = vunpack.c.l.b16 %v638
  %v673 = vunpack.c.h.b16 %v638
  %v674 = vunpack.c.l.b16 %v639
  %v675 = vunpack.c.h.b16 %v639
  %v676 = vunpack.c.l.b16 %v640
  %v677 = vunpack.c.h.b16 %v640
  %v678 = vunpack.c.l.b16 %v641
  %v679 = vunpack.c.h.b16 %v641
  %v680 = vunpack.c.l.b16 %v642
  %v681 = vunpack.c.h.b16 %v642
  %v682 = vunpack.c.l.b16 %v643
  %v683 = vunpack.c.h.b16 %v643
  %v684 = vunpack.c.l.b16 %v644
  %v685 = vunpack.c.h.b16 %v644
  %v686 = vunpack.c.l.b16 %v645
  %v687 = vunpack.c.h.b16 %v645
  %v688 = vunpack.c.l.b16 %v646
  %v689 = vunpack.c.h.b16 %v646
  %v690 = vunpack.c.l.b16 %v647
  %v691 = vunpack.c.h.b16 %v647
  %v692 = vunpack.c.l.b16 %v648
  %v693 = vunpack.c.h.b16 %v648
  %v694 = vunpack.c.l.b16 %v649
  %v695 = vunpack.c.h.b16 %v649
  %v696 = vunpack.c.l.b16 %v650
  %v697 = vunpack.c.h.b16 %v650
  %v698 = vunpack.c.l.b16 %v651
  %v699 = vunpack.c.h.b16 %v651
  %v700 = vpack.c.b16 %v670, %v668
  %v701 = vpack.c.b16 %v671, %v669
  %v702 = vpack.c.b16 %v674, %v672
  %v703 = vpack.c.b16 %v675, %v673
  %v704 = vpack.c.b16 %v678, %v676
  %v705 = vpack.c.b16 %v679, %v677
  %v706 = vpack.c.b16 %v682, %v680
  %v707 = vpack.c.b16 %v683, %v681
  %v708 = vpack.c.b16 %v686, %v684
  %v709 = vpack.c.b16 %v687, %v685
  %v710 = vpack.c.b16 %v690, %v688
  %v711 = vpack.c.b16 %v691, %v689
  %v712 = vpack.c.b16 %v694, %v692
  %v713 = vpack.c.b16 %v695, %v693
  %v714 = vpack.c.b16 %v698, %v696
  %v715 = vpack.c.b16 %v699, %v697
  %732 = vmatprep.subr.bf16.mxu0 %v701
  %733 = vmatpush1.bf16.msra.mxu0 %v700
  %734 = vmatprep.subr.bf16.mxu0 %v703
  %735 = vmatpush1.bf16.msra.mxu0 %v702
  %736 = vmatprep.subr.bf16.mxu0 %v705
  %737 = vmatpush1.bf16.msra.mxu0 %v704
  %738 = vmatprep.subr.bf16.mxu0 %v707
  %739 = vmatpush1.bf16.msra.mxu0 %v706
  %740 = vmatprep.subr.bf16.mxu0 %v709
  %741 = vmatpush1.bf16.msra.mxu0 %v708
  %742 = vmatprep.subr.bf16.mxu0 %v711
  %743 = vmatpush1.bf16.msra.mxu0 %v710
  %744 = vmatprep.subr.bf16.mxu0 %v713
  %745 = vmatpush1.bf16.msra.mxu0 %v712
  %746 = vmatprep.subr.bf16.mxu0 %v715
  %747 = vmatpush1.bf16.msra.mxu0 %v714
  %748 = vmatprep.subr.bf16.mxu0 0
  %749 = vmatpush1.bf16.msra.mxu0 0
  %750 = vmatprep.subr.bf16.mxu0 0
  %751 = vmatpush1.bf16.msra.mxu0 0
  %752 = vmatprep.subr.bf16.mxu0 0
  %753 = vmatpush1.bf16.msra.mxu0 0
  %754 = vmatprep.subr.bf16.mxu0 0
  %755 = vmatpush1.bf16.msra.mxu0 0
  %756 = vmatprep.subr.bf16.mxu0 0
  %757 = vmatpush1.bf16.msra.mxu0 0
  %758 = vmatprep.subr.bf16.mxu0 0
  %759 = vmatpush1.bf16.msra.mxu0 0
  %760 = vmatprep.subr.bf16.mxu0 0
  %761 = vmatpush1.bf16.msra.mxu0 0
  %762 = vmatprep.subr.bf16.mxu0 0
  %763 = vmatpush1.bf16.msra.mxu0 0
  %764 = vmatprep.mubr.bf16.mxu0 0
  %765 = vmatmul.mubr.bf16.gmra.mrb[0].mxu0 %v635
  %v766 = vpop.f32.mrb[0].mxu0
  %v767 = vadd.f32 0.0, %v766
  %v768 = vpop.f32.mrb[0].mxu0
  %v769 = vadd.f32 0.0, %v768
  %v770 = vpop.f32.mrb[0].mxu0
  %v771 = vpop.f32.mrb[0].mxu0
  %772 = vdwg.mxu0
  %v773 = vld [vmem:[%s10] sm:$0xff]
  %v774 = vld [vmem:[%s10 + $0x8] sm:$0xff]
  %v775 = vld [vmem:[%s10 + $0x10] sm:$0xff]
  %v776 = vld [vmem:[%s10 + $0x18] sm:$0xff]
  %v777 = vld [vmem:[%s10 + $0x20] sm:$0xff]
  %v778 = vld [vmem:[%s10 + $0x28] sm:$0xff]
  %v779 = vld [vmem:[%s10 + $0x30] sm:$0xff]
  %v780 = vld [vmem:[%s10 + $0x38] sm:$0xff]
  %v781 = vld [vmem:[%s10 + $0x40] sm:$0xff]
  %v782 = vld [vmem:[%s10 + $0x48] sm:$0xff]
  %v783 = vld [vmem:[%s10 + $0x50] sm:$0xff]
  %v784 = vld [vmem:[%s10 + $0x58] sm:$0xff]
  %v785 = vld [vmem:[%s10 + $0x60] sm:$0xff]
  %v786 = vld [vmem:[%s10 + $0x68] sm:$0xff]
  %v787 = vld [vmem:[%s10 + $0x70] sm:$0xff]
  %v788 = vld [vmem:[%s10 + $0x78] sm:$0xff]
  %v789 = vld [vmem:[%s10 + $0x80] sm:$0xff]
  %v790 = vld [vmem:[%s10 + $0x88] sm:$0xff]
  %v791 = vld [vmem:[%s10 + $0x90] sm:$0xff]
  %v792 = vld [vmem:[%s10 + $0x98] sm:$0xff]
  %v793 = vld [vmem:[%s10 + $0xa0] sm:$0xff]
  %v794 = vld [vmem:[%s10 + $0xa8] sm:$0xff]
  %v795 = vld [vmem:[%s10 + $0xb0] sm:$0xff]
  %v796 = vld [vmem:[%s10 + $0xb8] sm:$0xff]
  %v797 = vld [vmem:[%s10 + $0xc0] sm:$0xff]
  %v798 = vld [vmem:[%s10 + $0xc8] sm:$0xff]
  %v799 = vld [vmem:[%s10 + $0xd0] sm:$0xff]
  %v800 = vld [vmem:[%s10 + $0xd8] sm:$0xff]
  %v801 = vld [vmem:[%s10 + $0xe0] sm:$0xff]
  %v802 = vld [vmem:[%s10 + $0xe8] sm:$0xff]
  %v803 = vld [vmem:[%s10 + $0xf0] sm:$0xff]
  %v804 = vld [vmem:[%s10 + $0xf8] sm:$0xff]
  %v805 = vld [vmem:[%s11] sm:$0xff]
  %v806 = vld [vmem:[%s12] sm:$0x3]
  %v807 = vsel %vm132, %v767, 0.0
  %v808 = vrot.slane %v807, 4
  %v809 = vadd.f32 %v807, %v808
  %v810 = vrot.slane %v809, 2
  %v811 = vadd.f32 %v809, %v810
  %v812 = vrot.slane %v811, 1
  %v813 = vadd.f32 %v811, %v812
  %v814 = vsel %vm132, %v769, 0.0
  %v815 = vrot.slane %v814, 4
  %v816 = vadd.f32 %v814, %v815
  %v817 = vrot.slane %v816, 2
  %v818 = vadd.f32 %v816, %v817
  %v819 = vrot.slane %v818, 1
  %v820 = vadd.f32 %v818, %v819
  %v821 = vmul.f32 %v767, %v767
  %v822 = vmul.f32 %v769, %v769
  %v823 = vsel %vm132, %v821, 0.0
  %v824 = vrot.slane %v823, 4
  %v825 = vadd.f32 %v823, %v824
  %v826 = vrot.slane %v825, 2
  %v827 = vadd.f32 %v825, %v826
  %v828 = vrot.slane %v827, 1
  %v829 = vadd.f32 %v827, %v828
  %v830 = vsel %vm132, %v822, 0.0
  %v831 = vrot.slane %v830, 4
  %v832 = vadd.f32 %v830, %v831
  %v833 = vrot.slane %v832, 2
  %v834 = vadd.f32 %v832, %v833
  %v835 = vrot.slane %v834, 1
  %v836 = vadd.f32 %v834, %v835
  %v837 = vsel %vm148, %v813, %v829
  %v838 = vsel %vm148, %v820, %v836
  %839 = vmatprep.subr.mxu0 0.0
  %840 = vmatpush1.msra.mxu0 %v773
  %841 = vmatprep.subr.mxu0 0.0
  %842 = vmatpush1.msra.mxu0 %v774
  %843 = vmatprep.subr.mxu0 0.0
  %844 = vmatpush1.msra.mxu0 %v775
  %845 = vmatprep.subr.mxu0 0.0
  %846 = vmatpush1.msra.mxu0 %v776
  %847 = vmatprep.subr.mxu0 0.0
  %848 = vmatpush1.msra.mxu0 %v777
  %849 = vmatprep.subr.mxu0 0.0
  %850 = vmatpush1.msra.mxu0 %v778
  %851 = vmatprep.subr.mxu0 0.0
  %852 = vmatpush1.msra.mxu0 %v779
  %853 = vmatprep.subr.mxu0 0.0
  %854 = vmatpush1.msra.mxu0 %v780
  %855 = vmatprep.subr.mxu0 0.0
  %856 = vmatpush1.msra.mxu0 %v781
  %857 = vmatprep.subr.mxu0 0.0
  %858 = vmatpush1.msra.mxu0 %v782
  %859 = vmatprep.subr.mxu0 0.0
  %860 = vmatpush1.msra.mxu0 %v783
  %861 = vmatprep.subr.mxu0 0.0
  %862 = vmatpush1.msra.mxu0 %v784
  %863 = vmatprep.subr.mxu0 0.0
  %864 = vmatpush1.msra.mxu0 %v785
  %865 = vmatprep.subr.mxu0 0.0
  %866 = vmatpush1.msra.mxu0 %v786
  %867 = vmatprep.subr.mxu0 0.0
  %868 = vmatpush1.msra.mxu0 %v787
  %869 = vmatprep.subr.mxu0 0.0
  %870 = vmatpush1.msra.mxu0 %v788
  %871 = vmatprep.subr.mxu0 0.0
  %872 = vmatpush1.msra.mxu0 %v789
  %873 = vmatprep.subr.mxu0 0.0
  %874 = vmatpush1.msra.mxu0 %v790
  %875 = vmatprep.subr.mxu0 0.0
  %876 = vmatpush1.msra.mxu0 %v791
  %877 = vmatprep.subr.mxu0 0.0
  %878 = vmatpush1.msra.mxu0 %v792
  %879 = vmatprep.subr.mxu0 0.0
  %880 = vmatpush1.msra.mxu0 %v793
  %881 = vmatprep.subr.mxu0 0.0
  %882 = vmatpush1.msra.mxu0 %v794
  %883 = vmatprep.subr.mxu0 0.0
  %884 = vmatpush1.msra.mxu0 %v795
  %885 = vmatprep.subr.mxu0 0.0
  %886 = vmatpush1.msra.mxu0 %v796
  %887 = vmatprep.subr.mxu0 0.0
  %888 = vmatpush1.msra.mxu0 %v797
  %889 = vmatprep.subr.mxu0 0.0
  %890 = vmatpush1.msra.mxu0 %v798
  %891 = vmatprep.subr.mxu0 0.0
  %892 = vmatpush1.msra.mxu0 %v799
  %893 = vmatprep.subr.mxu0 0.0
  %894 = vmatpush1.msra.mxu0 %v800
  %895 = vmatprep.subr.mxu0 0.0
  %896 = vmatpush1.msra.mxu0 %v801
  %897 = vmatprep.subr.mxu0 0.0
  %898 = vmatpush1.msra.mxu0 %v802
  %899 = vmatprep.subr.mxu0 0.0
  %900 = vmatpush1.msra.mxu0 %v803
  %901 = vmatprep.subr.mxu0 0.0
  %902 = vmatpush1.msra.mxu0 %v804
  %903 = vmatprep.mubr.f32.mxu0 %v838
  %904 = vmatmul.mubr.f32.gmra.mrb[0].mxu0 %v837
  %v905 = vpop.f32.mrb[0].mxu0
  %v906 = vadd.f32 0.0, %v905
  %v907 = vpop.f32.mrb[0].mxu0
  %908 = vdwg.mxu0
  %v909 = vmul.f32 %v906, 0.5
  %v910 = vmul.f32 %v909, %v909
  %v912 = vrot.slane %v910, 7
  %v914 = vsub.f32 %v909, %v912
  %v915 = vadd.f32 %v914, 1e-05
  %v916 = vrsqrt.pop %v915
  %v918 = vrot.slane %v916, 1
  %v920 = vmul.f32 %v806, %v918
  %v921 = vmul.f32 %v909, %v920
  %v923 = vrot.slane %v921, 7
  %v925 = vsub.f32 %v806, %v923
  %v926 = vsel %vm148, %v920, %v925
  %v928 = vcombine.high %v805, %v805
  %vm929 = vcmask 31744
  %v931 = vsel %vm929, %v926, 0
  %vm933 = vcmask 1043456
  %v934 = vsel %vm933, %v805, 0
  %v936 = vsel %vm933, %v928, 0
  %938 = vmatprep.subr.mxu0 %v936
  %939 = vmatpush1.msra.mxu0 %v934
  %940 = vmatprep.subr.mxu0 0.0
  %941 = vmatpush1.msra.mxu0 0.0
  %942 = vmatprep.subr.mxu0 0.0
  %943 = vmatpush1.msra.mxu0 0.0
  %944 = vmatprep.subr.mxu0 0.0
  %945 = vmatpush1.msra.mxu0 0.0
  %946 = vmatprep.subr.mxu0 0.0
  %947 = vmatpush1.msra.mxu0 0.0
  %948 = vmatprep.subr.mxu0 0.0
  %949 = vmatpush1.msra.mxu0 0.0
  %950 = vmatprep.subr.mxu0 0.0
  %951 = vmatpush1.msra.mxu0 0.0
  %952 = vmatprep.subr.mxu0 0.0
  %953 = vmatpush1.msra.mxu0 0.0
  %954 = vmatprep.subr.mxu0 0.0
  %955 = vmatpush1.msra.mxu0 0.0
  %956 = vmatprep.subr.mxu0 0.0
  %957 = vmatpush1.msra.mxu0 0.0
  %958 = vmatprep.subr.mxu0 0.0
  %959 = vmatpush1.msra.mxu0 0.0
  %960 = vmatprep.subr.mxu0 0.0
  %961 = vmatpush1.msra.mxu0 0.0
  %962 = vmatprep.subr.mxu0 0.0
  %963 = vmatpush1.msra.mxu0 0.0
  %964 = vmatprep.subr.mxu0 0.0
  %965 = vmatpush1.msra.mxu0 0.0
  %966 = vmatprep.subr.mxu0 0.0
  %967 = vmatpush1.msra.mxu0 0.0
  %968 = vmatprep.subr.mxu0 0.0
  %969 = vmatpush1.msra.mxu0 0.0
  %970 = vmatprep.subr.mxu0 0.0
  %971 = vmatpush1.msra.mxu0 0.0
  %972 = vmatprep.subr.mxu0 0.0
  %973 = vmatpush1.msra.mxu0 0.0
  %974 = vmatprep.subr.mxu0 0.0
  %975 = vmatpush1.msra.mxu0 0.0
  %976 = vmatprep.subr.mxu0 0.0
  %977 = vmatpush1.msra.mxu0 0.0
  %978 = vmatprep.subr.mxu0 0.0
  %979 = vmatpush1.msra.mxu0 0.0
  %980 = vmatprep.subr.mxu0 0.0
  %981 = vmatpush1.msra.mxu0 0.0
  %982 = vmatprep.subr.mxu0 0.0
  %983 = vmatpush1.msra.mxu0 0.0
  %984 = vmatprep.subr.mxu0 0.0
  %985 = vmatpush1.msra.mxu0 0.0
  %986 = vmatprep.subr.mxu0 0.0
  %987 = vmatpush1.msra.mxu0 0.0
  %988 = vmatprep.subr.mxu0 0.0
  %989 = vmatpush1.msra.mxu0 0.0
  %990 = vmatprep.subr.mxu0 0.0
  %991 = vmatpush1.msra.mxu0 0.0
  %992 = vmatprep.subr.mxu0 0.0
  %993 = vmatpush1.msra.mxu0 0.0
  %994 = vmatprep.subr.mxu0 0.0
  %995 = vmatpush1.msra.mxu0 0.0
  %996 = vmatprep.subr.mxu0 0.0
  %997 = vmatpush1.msra.mxu0 0.0
  %998 = vmatprep.subr.mxu0 0.0
  %999 = vmatpush1.msra.mxu0 0.0
  %1000 = vmatprep.subr.mxu0 0.0
  %1001 = vmatpush1.msra.mxu0 0.0
  %1002 = vmatprep.mubr.f32.mxu0 0.0
  %1003 = vmatmul.mubr.f32.gmra.mrb[0].mxu0 %v931
  %v1004 = vpop.f32.mrb[0].mxu0
  %v1005 = vadd.f32 0.0, %v1004
  %v1006 = vpop.f32.mrb[0].mxu0
  %v1007 = vadd.f32 0.0, %v1006
  %1008 = vdwg.mxu0
  %v1009 = vlaneseq
  %v1010 = vshrl.u32 %v1009, 7
  %v1011 = vsub.s32 0, %v1010
  %v1012 = vrot.slane %v1005, %v1011
  %v1013 = vlaneseq
  %v1014 = vshrl.u32 %v1013, 7
  %v1015 = vsub.s32 0, %v1014
  %v1016 = vrot.slane %v1007, %v1015
  %v1017 = vmul.f32 %v767, %v1012
  %v1018 = vmul.f32 %v769, %v1016
  %v1019 = vlaneseq
  %v1020 = vshrl.u32 %v1019, 7
  %v1021 = vsub.s32 1, %v1020
  %v1022 = vrot.slane %v1005, %v1021
  %v1023 = vlaneseq
  %v1024 = vshrl.u32 %v1023, 7
  %v1025 = vsub.s32 1, %v1024
  %v1026 = vrot.slane %v1007, %v1025
  %v1027 = vadd.f32 %v1017, %v1022
  %v1028 = vadd.f32 %v1018, %v1026
  %v1029 = vmax.f32 %v1027, 0.0
  %v1030 = vmax.f32 %v1028, 0.0
  %v1031 = vpack.c.bf16 %v1029, %v1029
  %v1032 = vpack.c.bf16 %v1030, %v1030
  %v1033 = vld [vmem:[%s13] sm:$0xff]
  %v1034 = vld [vmem:[%s13 + $0x8] sm:$0xff]
  %v1035 = vld [vmem:[%s13 + $0x10] sm:$0xff]
  %v1036 = vld [vmem:[%s13 + $0x18] sm:$0xff]
  %v1037 = vld [vmem:[%s13 + $0x20] sm:$0xff]
  %v1038 = vld [vmem:[%s13 + $0x28] sm:$0xff]
  %v1039 = vld [vmem:[%s13 + $0x30] sm:$0xff]
  %v1040 = vld [vmem:[%s13 + $0x38] sm:$0xff]
  %v1041 = vld [vmem:[%s13 + $0x40] sm:$0xff]
  %v1042 = vld [vmem:[%s13 + $0x48] sm:$0xff]
  %v1043 = vld [vmem:[%s13 + $0x50] sm:$0xff]
  %v1044 = vld [vmem:[%s13 + $0x58] sm:$0xff]
  %v1045 = vld [vmem:[%s13 + $0x60] sm:$0xff]
  %v1046 = vld [vmem:[%s13 + $0x68] sm:$0xff]
  %v1047 = vld [vmem:[%s13 + $0x70] sm:$0xff]
  %v1048 = vld [vmem:[%s13 + $0x78] sm:$0xff]
  %v1049 = vld [vmem:[%s13 + $0x80] sm:$0xff]
  %v1050 = vld [vmem:[%s13 + $0x88] sm:$0xff]
  %v1051 = vld [vmem:[%s13 + $0x90] sm:$0xff]
  %v1052 = vld [vmem:[%s13 + $0x98] sm:$0xff]
  %v1053 = vld [vmem:[%s13 + $0xa0] sm:$0xff]
  %v1054 = vld [vmem:[%s13 + $0xa8] sm:$0xff]
  %v1055 = vld [vmem:[%s13 + $0xb0] sm:$0xff]
  %v1056 = vld [vmem:[%s13 + $0xb8] sm:$0xff]
  %v1057 = vld [vmem:[%s13 + $0xc0] sm:$0xff]
  %v1058 = vld [vmem:[%s13 + $0xc8] sm:$0xff]
  %v1059 = vld [vmem:[%s13 + $0xd0] sm:$0xff]
  %v1060 = vld [vmem:[%s13 + $0xd8] sm:$0xff]
  %v1061 = vld [vmem:[%s13 + $0xe0] sm:$0xff]
  %v1062 = vld [vmem:[%s13 + $0xe8] sm:$0xff]
  %v1063 = vld [vmem:[%s13 + $0xf0] sm:$0xff]
  %v1064 = vld [vmem:[%s13 + $0xf8] sm:$0xff]
  %v1065 = vld [vmem:[%s14] sm:$0x3]
  %v1067 = vlaneseq
  %v1068 = vshrl.u32 %v1067, 7
  %v1069 = vsub.s32 0, %v1068
  %v1070 = vrot.slane %v1065, %v1069
  %v1071 = vlaneseq
  %v1072 = vshrl.u32 %v1071, 7
  %v1073 = vsub.s32 1, %v1072
  %v1074 = vrot.slane %v1065, %v1073
  %v1109 = vunpack.c.l.b16 %v1033
  %v1110 = vunpack.c.h.b16 %v1033
  %v1111 = vunpack.c.l.b16 %v1034
  %v1112 = vunpack.c.h.b16 %v1034
  %v1113 = vunpack.c.l.b16 %v1035
  %v1114 = vunpack.c.h.b16 %v1035
  %v1115 = vunpack.c.l.b16 %v1036
  %v1116 = vunpack.c.h.b16 %v1036
  %v1117 = vunpack.c.l.b16 %v1037
  %v1118 = vunpack.c.h.b16 %v1037
  %v1119 = vunpack.c.l.b16 %v1038
  %v1120 = vunpack.c.h.b16 %v1038
  %v1121 = vunpack.c.l.b16 %v1039
  %v1122 = vunpack.c.h.b16 %v1039
  %v1123 = vunpack.c.l.b16 %v1040
  %v1124 = vunpack.c.h.b16 %v1040
  %v1125 = vunpack.c.l.b16 %v1041
  %v1126 = vunpack.c.h.b16 %v1041
  %v1127 = vunpack.c.l.b16 %v1042
  %v1128 = vunpack.c.h.b16 %v1042
  %v1129 = vunpack.c.l.b16 %v1043
  %v1130 = vunpack.c.h.b16 %v1043
  %v1131 = vunpack.c.l.b16 %v1044
  %v1132 = vunpack.c.h.b16 %v1044
  %v1133 = vunpack.c.l.b16 %v1045
  %v1134 = vunpack.c.h.b16 %v1045
  %v1135 = vunpack.c.l.b16 %v1046
  %v1136 = vunpack.c.h.b16 %v1046
  %v1137 = vunpack.c.l.b16 %v1047
  %v1138 = vunpack.c.h.b16 %v1047
  %v1139 = vunpack.c.l.b16 %v1048
  %v1140 = vunpack.c.h.b16 %v1048
  %v1141 = vunpack.c.l.b16 %v1049
  %v1142 = vunpack.c.h.b16 %v1049
  %v1143 = vunpack.c.l.b16 %v1050
  %v1144 = vunpack.c.h.b16 %v1050
  %v1145 = vunpack.c.l.b16 %v1051
  %v1146 = vunpack.c.h.b16 %v1051
  %v1147 = vunpack.c.l.b16 %v1052
  %v1148 = vunpack.c.h.b16 %v1052
  %v1149 = vunpack.c.l.b16 %v1053
  %v1150 = vunpack.c.h.b16 %v1053
  %v1151 = vunpack.c.l.b16 %v1054
  %v1152 = vunpack.c.h.b16 %v1054
  %v1153 = vunpack.c.l.b16 %v1055
  %v1154 = vunpack.c.h.b16 %v1055
  %v1155 = vunpack.c.l.b16 %v1056
  %v1156 = vunpack.c.h.b16 %v1056
  %v1157 = vunpack.c.l.b16 %v1057
  %v1158 = vunpack.c.h.b16 %v1057
  %v1159 = vunpack.c.l.b16 %v1058
  %v1160 = vunpack.c.h.b16 %v1058
  %v1161 = vunpack.c.l.b16 %v1059
  %v1162 = vunpack.c.h.b16 %v1059
  %v1163 = vunpack.c.l.b16 %v1060
  %v1164 = vunpack.c.h.b16 %v1060
  %v1165 = vunpack.c.l.b16 %v1061
  %v1166 = vunpack.c.h.b16 %v1061
  %v1167 = vunpack.c.l.b16 %v1062
  %v1168 = vunpack.c.h.b16 %v1062
  %v1169 = vunpack.c.l.b16 %v1063
  %v1170 = vunpack.c.h.b16 %v1063
  %v1171 = vunpack.c.l.b16 %v1064
  %v1172 = vunpack.c.h.b16 %v1064
  %v1173 = vpack.c.b16 %v1111, %v1109
  %v1174 = vpack.c.b16 %v1112, %v1110
  %v1175 = vpack.c.b16 %v1115, %v1113
  %v1176 = vpack.c.b16 %v1116, %v1114
  %v1177 = vpack.c.b16 %v1119, %v1117
  %v1178 = vpack.c.b16 %v1120, %v1118
  %v1179 = vpack.c.b16 %v1123, %v1121
  %v1180 = vpack.c.b16 %v1124, %v1122
  %v1181 = vpack.c.b16 %v1127, %v1125
  %v1182 = vpack.c.b16 %v1128, %v1126
  %v1183 = vpack.c.b16 %v1131, %v1129
  %v1184 = vpack.c.b16 %v1132, %v1130
  %v1185 = vpack.c.b16 %v1135, %v1133
  %v1186 = vpack.c.b16 %v1136, %v1134
  %v1187 = vpack.c.b16 %v1139, %v1137
  %v1188 = vpack.c.b16 %v1140, %v1138
  %v1189 = vpack.c.b16 %v1143, %v1141
  %v1190 = vpack.c.b16 %v1144, %v1142
  %v1191 = vpack.c.b16 %v1147, %v1145
  %v1192 = vpack.c.b16 %v1148, %v1146
  %v1193 = vpack.c.b16 %v1151, %v1149
  %v1194 = vpack.c.b16 %v1152, %v1150
  %v1195 = vpack.c.b16 %v1155, %v1153
  %v1196 = vpack.c.b16 %v1156, %v1154
  %v1197 = vpack.c.b16 %v1159, %v1157
  %v1198 = vpack.c.b16 %v1160, %v1158
  %v1199 = vpack.c.b16 %v1163, %v1161
  %v1200 = vpack.c.b16 %v1164, %v1162
  %v1201 = vpack.c.b16 %v1167, %v1165
  %v1202 = vpack.c.b16 %v1168, %v1166
  %v1203 = vpack.c.b16 %v1171, %v1169
  %v1204 = vpack.c.b16 %v1172, %v1170
  %1237 = vmatprep.subr.bf16.mxu0 %v1174
  %1238 = vmatpush1.bf16.msra.mxu0 %v1173
  %1239 = vmatprep.subr.bf16.mxu0 %v1176
  %1240 = vmatpush1.bf16.msra.mxu0 %v1175
  %1241 = vmatprep.subr.bf16.mxu0 %v1178
  %1242 = vmatpush1.bf16.msra.mxu0 %v1177
  %1243 = vmatprep.subr.bf16.mxu0 %v1180
  %1244 = vmatpush1.bf16.msra.mxu0 %v1179
  %1245 = vmatprep.subr.bf16.mxu0 %v1182
  %1246 = vmatpush1.bf16.msra.mxu0 %v1181
  %1247 = vmatprep.subr.bf16.mxu0 %v1184
  %1248 = vmatpush1.bf16.msra.mxu0 %v1183
  %1249 = vmatprep.subr.bf16.mxu0 %v1186
  %1250 = vmatpush1.bf16.msra.mxu0 %v1185
  %1251 = vmatprep.subr.bf16.mxu0 %v1188
  %1252 = vmatpush1.bf16.msra.mxu0 %v1187
  %1253 = vmatprep.subr.bf16.mxu0 %v1190
  %1254 = vmatpush1.bf16.msra.mxu0 %v1189
  %1255 = vmatprep.subr.bf16.mxu0 %v1192
  %1256 = vmatpush1.bf16.msra.mxu0 %v1191
  %1257 = vmatprep.subr.bf16.mxu0 %v1194
  %1258 = vmatpush1.bf16.msra.mxu0 %v1193
  %1259 = vmatprep.subr.bf16.mxu0 %v1196
  %1260 = vmatpush1.bf16.msra.mxu0 %v1195
  %1261 = vmatprep.subr.bf16.mxu0 %v1198
  %1262 = vmatpush1.bf16.msra.mxu0 %v1197
  %1263 = vmatprep.subr.bf16.mxu0 %v1200
  %1264 = vmatpush1.bf16.msra.mxu0 %v1199
  %1265 = vmatprep.subr.bf16.mxu0 %v1202
  %1266 = vmatpush1.bf16.msra.mxu0 %v1201
  %1267 = vmatprep.subr.bf16.mxu0 %v1204
  %1268 = vmatpush1.bf16.msra.mxu0 %v1203
  %1269 = vmatprep.mubr.bf16.mxu0 %v1032
  %1270 = vmatmul.mubr.bf16.gmra.mrb[0].mxu0 %v1031
  %v1271 = vpop.f32.mrb[0].mxu0
  %v1272 = vadd.f32 %v1070, %v1271
  %v1273 = vpop.f32.mrb[0].mxu0
  %v1274 = vadd.f32 %v1074, %v1273
  %v1275 = vpop.f32.mrb[0].mxu0
  %v1276 = vpop.f32.mrb[0].mxu0
  %1277 = vdwg.mxu0
  %v1280 = vcombine.low %v1272, %v1274
  %v1282 = vunpack.c.l.s4 1983009808
  %v1283 = vunpack.c.0.s8 %v1282
  %v1284 = vlaneseq
  %v1285 = vshrl.u32 %v1284, 7
  %v1286 = vsub.s32 %v1283, %v1285
  %v1287 = vrot.slane %v1280, %v1286
  %1289 = vst [vmem:[%s15] sm:$0xf] %v1287
  // Predicated region
  $region62: #{forward.1} parent=0 // pred_check
    _
  $region63: #{forward.1} parent=0 // pred_check_branch
    %1291 = sbr.rel (0) target = $region65
  $region64: #{forward.1} parent=0 // pred_region
    _
  $region65: #{forward.1} parent=0 // pred_fallthru
    _
  // Predicated region
  $region66: #{forward.1} parent=0 // pred_check
    _
  $region67: #{forward.1} parent=0 // pred_check_branch
    %1293 = sbr.rel (0) target = $region69
  $region68: #{forward.1} parent=0 // pred_region
    _
  $region69: #{forward.1} parent=0 // pred_fallthru
    _

</llo_original>
